<compile_context>
chip_gen: v7x
topology: tpu7x:2x2x1
jax: 0.10.0
libtpu: 0.0.40
codegen_flags: <defaults>
</compile_context>

<pallas_src>
import functools

import jax
import jax.numpy as jnp
from jax.experimental import pallas as pl
from jax.experimental.pallas import tpu as pltpu

# (in_features, out_features) for each Linear layer.
LAYER_DIMS = [(2, 16), (16, 32), (32, 64), (64, 128), (128, 64),
              (64, 32), (32, 16), (16, 8), (8, 2), (2, 1)]
NUM_LAYERS = len(LAYER_DIMS)
PAD = 128              # padded feature width (lane dim) inside the kernel
NEG_SLOPE = 0.2
ROW_ALIGN = 16         # sublane pack granularity for bf16 rows
MAX_TB = 2048          # max batch tile (sublane dim); footprint stays << VMEM
SMALL = 512            # up to this padded batch: just two balanced small tiles


def _round_up(x, m):
    return ((x + m - 1) // m) * m


def _cdiv(a, b):
    return -(-a // b)


def _pick_tiling(batch):
    """Return (tile_rows, padded_batch).

    Targets an even number of balanced tiles (>=2) so both v7x TensorCores get
    work via dimension_semantics=("parallel",), while only padding small batches
    to the 16-row sublane pack (not a 128-row floor)."""
    b = _round_up(batch, ROW_ALIGN)
    if b <= ROW_ALIGN:
        return b, b                                  # tiny batch: one small tile
    if b <= SMALL:
        tb = _round_up(_cdiv(b, 2), ROW_ALIGN)       # two balanced small tiles
        return tb, 2 * tb
    n = max(2, _cdiv(b, MAX_TB))
    if n % 2:
        n += 1                                       # even, balanced step count
    tb = _round_up(_cdiv(b, n), ROW_ALIGN)
    return tb, tb * n


def _on_v5e():
    """v5e has no bf16 VPU -> keep the epilogue in f32 there."""
    try:
        kind = jax.devices()[0].device_kind.lower()
    except Exception:
        return False
    return ("v5 lite" in kind) or ("v5e" in kind) or ("v5lite" in kind)


def _leaky(h):
    # LeakyReLU(0.2): max(h, 0.2*h) is exact for slope < 1, one VPU op.
    return jnp.maximum(h, NEG_SLOPE * h)


def _mlp_kernel(w_ref, b_ref, x_ref, o_ref, *, nchunk, act_dtype):
    # w_ref: (NUM_LAYERS, PAD, PAD) bf16   b_ref: (NUM_LAYERS, 1, PAD) f32
    # x_ref: (TB, 2) f32                   o_ref: (TB, 1) f32
    tb = x_ref.shape[0]
    ch = tb // nchunk

    # Layer 0 (2 -> 16, zero-padded to 128 lanes) as VPU broadcast FMAs in f32.
    w0a = w_ref[0, 0:1, :].astype(jnp.float32)   # (1, PAD)
    w0b = w_ref[0, 1:2, :].astype(jnp.float32)   # (1, PAD)
    b0 = b_ref[0]                                # (1, PAD) f32

    hs = []
    for c in range(nchunk):
        xc = x_ref[pl.ds(c * ch, ch), :]                    # (ch, 2) f32
        h = xc[:, 0:1] * w0a + xc[:, 1:2] * w0b + b0        # (ch, PAD) f32
        hs.append(_leaky(h).astype(act_dtype))

    # Layers 1..9: bf16 MXU matmuls with f32 accumulation; bias + LeakyReLU
    # epilogue in act_dtype (bf16 on v6e/v7x, f32 on v5e).  The unrolled layer
    # loop is interleaved across independent row chunks so one chunk's VPU
    # epilogue hides under the other chunks' MXU pushes.
    for l in range(1, NUM_LAYERS):
        w = w_ref[l]                           # (PAD, PAD) bf16
        b = b_ref[l].astype(act_dtype)         # (1, PAD)
        nxt = []
        for h in hs:
            lhs = h if h.dtype == jnp.bfloat16 else h.astype(jnp.bfloat16)
            acc = jnp.dot(lhs, w, preferred_element_type=jnp.float32)
            nxt.append(_leaky(acc.astype(act_dtype) + b))
        hs = nxt

    # Only lane 0 (the real logit) goes back to HBM.
    for c in range(nchunk):
        o_ref[pl.ds(c * ch, ch), :] = hs[c][:, 0:1].astype(o_ref.dtype)


@jax.jit
def discriminator_forward(x, w_stack, b_stack):
    """x: (B, 2) f32 -> (B, 1) f32."""
    batch = x.shape[0]
    tb, b_pad = _pick_tiling(batch)

    f32_epilogue = _on_v5e()
    act_dtype = jnp.float32 if f32_epilogue else jnp.bfloat16
    # v5e: 4 independent matmul streams to feed its 4x(128x128) MXUs; elsewhere 2.
    if f32_epilogue and tb % 32 == 0 and tb >= 128:
        nchunk = 4
    else:
        nchunk = 2

    # Only pad batch rows (features stay at width 2): tiny HBM footprint.
    x_p = jnp.pad(x.astype(jnp.float32), ((0, b_pad - batch), (0, 0)))
    w = w_stack if w_stack.dtype == jnp.bfloat16 else w_stack.astype(jnp.bfloat16)
    b = b_stack.astype(jnp.float32)

    kernel = functools.partial(_mlp_kernel, nchunk=nchunk, act_dtype=act_dtype)

    out_p = pl.pallas_call(
        kernel,
        out_shape=jax.ShapeDtypeStruct((b_pad, 1), jnp.float32),
        grid_spec=pltpu.PrefetchScalarGridSpec(
            num_scalar_prefetch=0,
            grid=(b_pad // tb,),
            in_specs=[
                # weights / biases: constant index_map => fetched once, stay
                # VMEM-resident across grid steps (total << scoped VMEM limit,
                # so no vmem_limit_bytes / buffering tweaks needed).
                pl.BlockSpec((NUM_LAYERS, PAD, PAD), lambda i: (0, 0, 0)),
                pl.BlockSpec((NUM_LAYERS, 1, PAD), lambda i: (0, 0, 0)),
                # activations: one narrow (TB, 2) batch tile per grid step
                pl.BlockSpec((tb, 2), lambda i: (i, 0)),
            ],
            out_specs=pl.BlockSpec((tb, 1), lambda i: (i, 0)),
        ),
        compiler_params=pltpu.CompilerParams(
            dimension_semantics=("parallel",)),
    )(w, b, x_p)

    return out_p[:batch, :]


def init_params(key):
    """Deterministic init mimicking PyTorch Linear default (U[-1/sqrt(fan_in), +])."""
    w_stack = jnp.zeros((NUM_LAYERS, PAD, PAD), jnp.float32)
    b_stack = jnp.zeros((NUM_LAYERS, 1, PAD), jnp.float32)
    for l, (fin, fout) in enumerate(LAYER_DIMS):
        key, kw, kb = jax.random.split(key, 3)
        bound = 1.0 / (fin ** 0.5)
        wl = jax.random.uniform(kw, (fin, fout), jnp.float32, -bound, bound)
        bl = jax.random.uniform(kb, (fout,), jnp.float32, -bound, bound)
        w_stack = w_stack.at[l, :fin, :fout].set(wl)
        b_stack = b_stack.at[l, 0, :fout].set(bl)
    # Weights are stored in bf16 (MXU operand dtype); biases stay f32.
    return w_stack.astype(jnp.bfloat16), b_stack


def reference_forward(x, w_stack, b_stack):
    """Plain-JAX f32 reference of the same MLP (uses the bf16-rounded weights)."""
    h = x.astype(jnp.float32)
    for l, (fin, fout) in enumerate(LAYER_DIMS):
        w = w_stack[l, :fin, :fout].astype(jnp.float32)
        b = b_stack[l, 0, :fout].astype(jnp.float32)
        h = h @ w + b
        h = jnp.maximum(h, NEG_SLOPE * h)
    return h


if __name__ == "__main__":
    key = jax.random.PRNGKey(0)
    k_param, k_data, k_data2 = jax.random.split(key, 3)

    w_stack, b_stack = init_params(k_param)

    # Small shape consistent with the module: Discriminator input is (B, 2).
    B = 8
    x = jax.random.normal(k_data, (B, 2), jnp.float32)
    out = jax.block_until_ready(discriminator_forward(x, w_stack, b_stack))
    ref = reference_forward(x, w_stack, b_stack)
    assert out.shape == (B, 1), out.shape
    # bf16 weights + bf16 inter-layer activations over 10 layers => loose tolerance.
    assert jnp.allclose(out, ref, atol=1e-2, rtol=5e-2), (out, ref)

    # Second check: batch that exercises row padding and a 2-step grid.
    B2 = 300
    x2 = jax.random.normal(k_data2, (B2, 2), jnp.float32)
    out2 = jax.block_until_ready(discriminator_forward(x2, w_stack, b_stack))
    ref2 = reference_forward(x2, w_stack, b_stack)
    assert out2.shape == (B2, 1), out2.shape
    assert jnp.allclose(out2, ref2, atol=1e-2, rtol=5e-2)

    print("KERNEL_OK")
</pallas_src>

<mosaic_0001>
module attributes {stable_mosaic.version = 11 : i64} {
  func.func @_mlp_kernel(%arg0: i32, %arg1: memref<10x128x128xbf16, #tpu.memory_space<vmem>>, %arg2: memref<10x1x128xf32, #tpu.memory_space<vmem>>, %arg3: memref<16x2xf32, #tpu.memory_space<vmem>>, %arg4: memref<16x1xf32, #tpu.memory_space<vmem>>) attributes {dimension_semantics = [#tpu.dimension_semantics<parallel>], iteration_bounds = array<i64: 1>, scalar_prefetch = 0 : i64, scratch_operands = 0 : i64, tpu.core_type = #tpu.core_type<tc>, window_params = [{pipeline_mode = #tpu.pipeline_mode<synchronous>, transform_indices = @transform_0, window_bounds = array<i64: 10, 128, 128>}, {pipeline_mode = #tpu.pipeline_mode<synchronous>, transform_indices = @transform_1, window_bounds = array<i64: 10, 1, 128>}, {transform_indices = @transform_2, window_bounds = array<i64: 16, 2>}, {transform_indices = @transform_3, window_bounds = array<i64: 16, 1>}]} {
    %c0 = arith.constant 0 : index
    %c0_0 = arith.constant 0 : index
    %c0_1 = arith.constant 0 : index
    %0 = vector.load %arg1[%c0, %c0_0, %c0_1] : memref<10x128x128xbf16, #tpu.memory_space<vmem>>, vector<1x1x128xbf16>
    %1 = vector.shape_cast %0 : vector<1x1x128xbf16> to vector<1x128xbf16>
    %2 = arith.extf %1 : vector<1x128xbf16> to vector<1x128xf32>
    %c0_2 = arith.constant 0 : index
    %c1 = arith.constant 1 : index
    %c0_3 = arith.constant 0 : index
    %3 = vector.load %arg1[%c0_2, %c1, %c0_3] : memref<10x128x128xbf16, #tpu.memory_space<vmem>>, vector<1x1x128xbf16>
    %4 = vector.shape_cast %3 : vector<1x1x128xbf16> to vector<1x128xbf16>
    %5 = arith.extf %4 : vector<1x128xbf16> to vector<1x128xf32>
    %c0_4 = arith.constant 0 : index
    %c0_5 = arith.constant 0 : index
    %c0_6 = arith.constant 0 : index
    %6 = vector.load %arg2[%c0_4, %c0_5, %c0_6] : memref<10x1x128xf32, #tpu.memory_space<vmem>>, vector<1x1x128xf32>
    %7 = vector.shape_cast %6 : vector<1x1x128xf32> to vector<1x128xf32>
    %c0_7 = arith.constant 0 : index
    %c0_8 = arith.constant 0 : index
    %8 = vector.load %arg3[%c0_7, %c0_8] : memref<16x2xf32, #tpu.memory_space<vmem>>, vector<8x2xf32>
    %9 = vector.extract_strided_slice %8 {offsets = [0, 0], sizes = [8, 1], strides = [1, 1]} : vector<8x2xf32> to vector<8x1xf32>
    %10 = vector.broadcast %9 : vector<8x1xf32> to vector<8x128xf32>
    %11 = vector.broadcast %2 : vector<1x128xf32> to vector<8x128xf32>
    %12 = arith.mulf %10, %11 : vector<8x128xf32>
    %13 = vector.extract_strided_slice %8 {offsets = [0, 1], sizes = [8, 1], strides = [1, 1]} : vector<8x2xf32> to vector<8x1xf32>
    %14 = vector.broadcast %13 : vector<8x1xf32> to vector<8x128xf32>
    %15 = vector.broadcast %5 : vector<1x128xf32> to vector<8x128xf32>
    %16 = arith.mulf %14, %15 : vector<8x128xf32>
    %17 = arith.addf %12, %16 : vector<8x128xf32>
    %18 = vector.broadcast %7 : vector<1x128xf32> to vector<8x128xf32>
    %19 = arith.addf %17, %18 : vector<8x128xf32>
    %cst = arith.constant 2.000000e-01 : f32
    %20 = vector.broadcast %cst : f32 to vector<8x128xf32>
    %21 = arith.mulf %20, %19 : vector<8x128xf32>
    %22 = arith.maximumf %19, %21 : vector<8x128xf32>
    %23 = arith.truncf %22 : vector<8x128xf32> to vector<8x128xbf16>
    %c8 = arith.constant 8 : index
    %c0_9 = arith.constant 0 : index
    %24 = vector.load %arg3[%c8, %c0_9] : memref<16x2xf32, #tpu.memory_space<vmem>>, vector<8x2xf32>
    %25 = vector.extract_strided_slice %24 {offsets = [0, 0], sizes = [8, 1], strides = [1, 1]} : vector<8x2xf32> to vector<8x1xf32>
    %26 = vector.broadcast %25 : vector<8x1xf32> to vector<8x128xf32>
    %27 = vector.broadcast %2 : vector<1x128xf32> to vector<8x128xf32>
    %28 = arith.mulf %26, %27 : vector<8x128xf32>
    %29 = vector.extract_strided_slice %24 {offsets = [0, 1], sizes = [8, 1], strides = [1, 1]} : vector<8x2xf32> to vector<8x1xf32>
    %30 = vector.broadcast %29 : vector<8x1xf32> to vector<8x128xf32>
    %31 = vector.broadcast %5 : vector<1x128xf32> to vector<8x128xf32>
    %32 = arith.mulf %30, %31 : vector<8x128xf32>
    %33 = arith.addf %28, %32 : vector<8x128xf32>
    %34 = vector.broadcast %7 : vector<1x128xf32> to vector<8x128xf32>
    %35 = arith.addf %33, %34 : vector<8x128xf32>
    %cst_10 = arith.constant 2.000000e-01 : f32
    %36 = vector.broadcast %cst_10 : f32 to vector<8x128xf32>
    %37 = arith.mulf %36, %35 : vector<8x128xf32>
    %38 = arith.maximumf %35, %37 : vector<8x128xf32>
    %39 = arith.truncf %38 : vector<8x128xf32> to vector<8x128xbf16>
    %c1_11 = arith.constant 1 : index
    %c0_12 = arith.constant 0 : index
    %c0_13 = arith.constant 0 : index
    %40 = vector.load %arg1[%c1_11, %c0_12, %c0_13] : memref<10x128x128xbf16, #tpu.memory_space<vmem>>, vector<1x128x128xbf16>
    %41 = vector.shape_cast %40 : vector<1x128x128xbf16> to vector<128x128xbf16>
    %c1_14 = arith.constant 1 : index
    %c0_15 = arith.constant 0 : index
    %c0_16 = arith.constant 0 : index
    %42 = vector.load %arg2[%c1_14, %c0_15, %c0_16] : memref<10x1x128xf32, #tpu.memory_space<vmem>>, vector<1x1x128xf32>
    %43 = vector.shape_cast %42 : vector<1x1x128xf32> to vector<1x128xf32>
    %44 = arith.truncf %43 : vector<1x128xf32> to vector<1x128xbf16>
    %cst_17 = arith.constant dense<0.000000e+00> : vector<8x128xf32>
    %45 = tpu.matmul %23, %41, %cst_17 {dimension_numbers = #tpu.dot_dimension_numbers<[1], [0], [0], [1], [0, 0, 1, 1], [], []>} : vector<8x128xbf16>, vector<128x128xbf16>, vector<8x128xf32> -> vector<8x128xf32>
    %46 = arith.truncf %45 : vector<8x128xf32> to vector<8x128xbf16>
    %47 = vector.broadcast %44 : vector<1x128xbf16> to vector<8x128xbf16>
    %48 = arith.addf %46, %47 : vector<8x128xbf16>
    %cst_18 = arith.constant 2.001950e-01 : bf16
    %49 = vector.broadcast %cst_18 : bf16 to vector<8x128xbf16>
    %50 = arith.mulf %49, %48 : vector<8x128xbf16>
    %51 = arith.maximumf %48, %50 : vector<8x128xbf16>
    %cst_19 = arith.constant dense<0.000000e+00> : vector<8x128xf32>
    %52 = tpu.matmul %39, %41, %cst_19 {dimension_numbers = #tpu.dot_dimension_numbers<[1], [0], [0], [1], [0, 0, 1, 1], [], []>} : vector<8x128xbf16>, vector<128x128xbf16>, vector<8x128xf32> -> vector<8x128xf32>
    %53 = arith.truncf %52 : vector<8x128xf32> to vector<8x128xbf16>
    %54 = vector.broadcast %44 : vector<1x128xbf16> to vector<8x128xbf16>
    %55 = arith.addf %53, %54 : vector<8x128xbf16>
    %cst_20 = arith.constant 2.001950e-01 : bf16
    %56 = vector.broadcast %cst_20 : bf16 to vector<8x128xbf16>
    %57 = arith.mulf %56, %55 : vector<8x128xbf16>
    %58 = arith.maximumf %55, %57 : vector<8x128xbf16>
    %c2 = arith.constant 2 : index
    %c0_21 = arith.constant 0 : index
    %c0_22 = arith.constant 0 : index
    %59 = vector.load %arg1[%c2, %c0_21, %c0_22] : memref<10x128x128xbf16, #tpu.memory_space<vmem>>, vector<1x128x128xbf16>
    %60 = vector.shape_cast %59 : vector<1x128x128xbf16> to vector<128x128xbf16>
    %c2_23 = arith.constant 2 : index
    %c0_24 = arith.constant 0 : index
    %c0_25 = arith.constant 0 : index
    %61 = vector.load %arg2[%c2_23, %c0_24, %c0_25] : memref<10x1x128xf32, #tpu.memory_space<vmem>>, vector<1x1x128xf32>
    %62 = vector.shape_cast %61 : vector<1x1x128xf32> to vector<1x128xf32>
    %63 = arith.truncf %62 : vector<1x128xf32> to vector<1x128xbf16>
    %cst_26 = arith.constant dense<0.000000e+00> : vector<8x128xf32>
    %64 = tpu.matmul %51, %60, %cst_26 {dimension_numbers = #tpu.dot_dimension_numbers<[1], [0], [0], [1], [0, 0, 1, 1], [], []>} : vector<8x128xbf16>, vector<128x128xbf16>, vector<8x128xf32> -> vector<8x128xf32>
    %65 = arith.truncf %64 : vector<8x128xf32> to vector<8x128xbf16>
    %66 = vector.broadcast %63 : vector<1x128xbf16> to vector<8x128xbf16>
    %67 = arith.addf %65, %66 : vector<8x128xbf16>
    %cst_27 = arith.constant 2.001950e-01 : bf16
    %68 = vector.broadcast %cst_27 : bf16 to vector<8x128xbf16>
    %69 = arith.mulf %68, %67 : vector<8x128xbf16>
    %70 = arith.maximumf %67, %69 : vector<8x128xbf16>
    %cst_28 = arith.constant dense<0.000000e+00> : vector<8x128xf32>
    %71 = tpu.matmul %58, %60, %cst_28 {dimension_numbers = #tpu.dot_dimension_numbers<[1], [0], [0], [1], [0, 0, 1, 1], [], []>} : vector<8x128xbf16>, vector<128x128xbf16>, vector<8x128xf32> -> vector<8x128xf32>
    %72 = arith.truncf %71 : vector<8x128xf32> to vector<8x128xbf16>
    %73 = vector.broadcast %63 : vector<1x128xbf16> to vector<8x128xbf16>
    %74 = arith.addf %72, %73 : vector<8x128xbf16>
    %cst_29 = arith.constant 2.001950e-01 : bf16
    %75 = vector.broadcast %cst_29 : bf16 to vector<8x128xbf16>
    %76 = arith.mulf %75, %74 : vector<8x128xbf16>
    %77 = arith.maximumf %74, %76 : vector<8x128xbf16>
    %c3 = arith.constant 3 : index
    %c0_30 = arith.constant 0 : index
    %c0_31 = arith.constant 0 : index
    %78 = vector.load %arg1[%c3, %c0_30, %c0_31] : memref<10x128x128xbf16, #tpu.memory_space<vmem>>, vector<1x128x128xbf16>
    %79 = vector.shape_cast %78 : vector<1x128x128xbf16> to vector<128x128xbf16>
    %c3_32 = arith.constant 3 : index
    %c0_33 = arith.constant 0 : index
    %c0_34 = arith.constant 0 : index
    %80 = vector.load %arg2[%c3_32, %c0_33, %c0_34] : memref<10x1x128xf32, #tpu.memory_space<vmem>>, vector<1x1x128xf32>
    %81 = vector.shape_cast %80 : vector<1x1x128xf32> to vector<1x128xf32>
    %82 = arith.truncf %81 : vector<1x128xf32> to vector<1x128xbf16>
    %cst_35 = arith.constant dense<0.000000e+00> : vector<8x128xf32>
    %83 = tpu.matmul %70, %79, %cst_35 {dimension_numbers = #tpu.dot_dimension_numbers<[1], [0], [0], [1], [0, 0, 1, 1], [], []>} : vector<8x128xbf16>, vector<128x128xbf16>, vector<8x128xf32> -> vector<8x128xf32>
    %84 = arith.truncf %83 : vector<8x128xf32> to vector<8x128xbf16>
    %85 = vector.broadcast %82 : vector<1x128xbf16> to vector<8x128xbf16>
    %86 = arith.addf %84, %85 : vector<8x128xbf16>
    %cst_36 = arith.constant 2.001950e-01 : bf16
    %87 = vector.broadcast %cst_36 : bf16 to vector<8x128xbf16>
    %88 = arith.mulf %87, %86 : vector<8x128xbf16>
    %89 = arith.maximumf %86, %88 : vector<8x128xbf16>
    %cst_37 = arith.constant dense<0.000000e+00> : vector<8x128xf32>
    %90 = tpu.matmul %77, %79, %cst_37 {dimension_numbers = #tpu.dot_dimension_numbers<[1], [0], [0], [1], [0, 0, 1, 1], [], []>} : vector<8x128xbf16>, vector<128x128xbf16>, vector<8x128xf32> -> vector<8x128xf32>
    %91 = arith.truncf %90 : vector<8x128xf32> to vector<8x128xbf16>
    %92 = vector.broadcast %82 : vector<1x128xbf16> to vector<8x128xbf16>
    %93 = arith.addf %91, %92 : vector<8x128xbf16>
    %cst_38 = arith.constant 2.001950e-01 : bf16
    %94 = vector.broadcast %cst_38 : bf16 to vector<8x128xbf16>
    %95 = arith.mulf %94, %93 : vector<8x128xbf16>
    %96 = arith.maximumf %93, %95 : vector<8x128xbf16>
    %c4 = arith.constant 4 : index
    %c0_39 = arith.constant 0 : index
    %c0_40 = arith.constant 0 : index
    %97 = vector.load %arg1[%c4, %c0_39, %c0_40] : memref<10x128x128xbf16, #tpu.memory_space<vmem>>, vector<1x128x128xbf16>
    %98 = vector.shape_cast %97 : vector<1x128x128xbf16> to vector<128x128xbf16>
    %c4_41 = arith.constant 4 : index
    %c0_42 = arith.constant 0 : index
    %c0_43 = arith.constant 0 : index
    %99 = vector.load %arg2[%c4_41, %c0_42, %c0_43] : memref<10x1x128xf32, #tpu.memory_space<vmem>>, vector<1x1x128xf32>
    %100 = vector.shape_cast %99 : vector<1x1x128xf32> to vector<1x128xf32>
    %101 = arith.truncf %100 : vector<1x128xf32> to vector<1x128xbf16>
    %cst_44 = arith.constant dense<0.000000e+00> : vector<8x128xf32>
    %102 = tpu.matmul %89, %98, %cst_44 {dimension_numbers = #tpu.dot_dimension_numbers<[1], [0], [0], [1], [0, 0, 1, 1], [], []>} : vector<8x128xbf16>, vector<128x128xbf16>, vector<8x128xf32> -> vector<8x128xf32>
    %103 = arith.truncf %102 : vector<8x128xf32> to vector<8x128xbf16>
    %104 = vector.broadcast %101 : vector<1x128xbf16> to vector<8x128xbf16>
    %105 = arith.addf %103, %104 : vector<8x128xbf16>
    %cst_45 = arith.constant 2.001950e-01 : bf16
    %106 = vector.broadcast %cst_45 : bf16 to vector<8x128xbf16>
    %107 = arith.mulf %106, %105 : vector<8x128xbf16>
    %108 = arith.maximumf %105, %107 : vector<8x128xbf16>
    %cst_46 = arith.constant dense<0.000000e+00> : vector<8x128xf32>
    %109 = tpu.matmul %96, %98, %cst_46 {dimension_numbers = #tpu.dot_dimension_numbers<[1], [0], [0], [1], [0, 0, 1, 1], [], []>} : vector<8x128xbf16>, vector<128x128xbf16>, vector<8x128xf32> -> vector<8x128xf32>
    %110 = arith.truncf %109 : vector<8x128xf32> to vector<8x128xbf16>
    %111 = vector.broadcast %101 : vector<1x128xbf16> to vector<8x128xbf16>
    %112 = arith.addf %110, %111 : vector<8x128xbf16>
    %cst_47 = arith.constant 2.001950e-01 : bf16
    %113 = vector.broadcast %cst_47 : bf16 to vector<8x128xbf16>
    %114 = arith.mulf %113, %112 : vector<8x128xbf16>
    %115 = arith.maximumf %112, %114 : vector<8x128xbf16>
    %c5 = arith.constant 5 : index
    %c0_48 = arith.constant 0 : index
    %c0_49 = arith.constant 0 : index
    %116 = vector.load %arg1[%c5, %c0_48, %c0_49] : memref<10x128x128xbf16, #tpu.memory_space<vmem>>, vector<1x128x128xbf16>
    %117 = vector.shape_cast %116 : vector<1x128x128xbf16> to vector<128x128xbf16>
    %c5_50 = arith.constant 5 : index
    %c0_51 = arith.constant 0 : index
    %c0_52 = arith.constant 0 : index
    %118 = vector.load %arg2[%c5_50, %c0_51, %c0_52] : memref<10x1x128xf32, #tpu.memory_space<vmem>>, vector<1x1x128xf32>
    %119 = vector.shape_cast %118 : vector<1x1x128xf32> to vector<1x128xf32>
    %120 = arith.truncf %119 : vector<1x128xf32> to vector<1x128xbf16>
    %cst_53 = arith.constant dense<0.000000e+00> : vector<8x128xf32>
    %121 = tpu.matmul %108, %117, %cst_53 {dimension_numbers = #tpu.dot_dimension_numbers<[1], [0], [0], [1], [0, 0, 1, 1], [], []>} : vector<8x128xbf16>, vector<128x128xbf16>, vector<8x128xf32> -> vector<8x128xf32>
    %122 = arith.truncf %121 : vector<8x128xf32> to vector<8x128xbf16>
    %123 = vector.broadcast %120 : vector<1x128xbf16> to vector<8x128xbf16>
    %124 = arith.addf %122, %123 : vector<8x128xbf16>
    %cst_54 = arith.constant 2.001950e-01 : bf16
    %125 = vector.broadcast %cst_54 : bf16 to vector<8x128xbf16>
    %126 = arith.mulf %125, %124 : vector<8x128xbf16>
    %127 = arith.maximumf %124, %126 : vector<8x128xbf16>
    %cst_55 = arith.constant dense<0.000000e+00> : vector<8x128xf32>
    %128 = tpu.matmul %115, %117, %cst_55 {dimension_numbers = #tpu.dot_dimension_numbers<[1], [0], [0], [1], [0, 0, 1, 1], [], []>} : vector<8x128xbf16>, vector<128x128xbf16>, vector<8x128xf32> -> vector<8x128xf32>
    %129 = arith.truncf %128 : vector<8x128xf32> to vector<8x128xbf16>
    %130 = vector.broadcast %120 : vector<1x128xbf16> to vector<8x128xbf16>
    %131 = arith.addf %129, %130 : vector<8x128xbf16>
    %cst_56 = arith.constant 2.001950e-01 : bf16
    %132 = vector.broadcast %cst_56 : bf16 to vector<8x128xbf16>
    %133 = arith.mulf %132, %131 : vector<8x128xbf16>
    %134 = arith.maximumf %131, %133 : vector<8x128xbf16>
    %c6 = arith.constant 6 : index
    %c0_57 = arith.constant 0 : index
    %c0_58 = arith.constant 0 : index
    %135 = vector.load %arg1[%c6, %c0_57, %c0_58] : memref<10x128x128xbf16, #tpu.memory_space<vmem>>, vector<1x128x128xbf16>
    %136 = vector.shape_cast %135 : vector<1x128x128xbf16> to vector<128x128xbf16>
    %c6_59 = arith.constant 6 : index
    %c0_60 = arith.constant 0 : index
    %c0_61 = arith.constant 0 : index
    %137 = vector.load %arg2[%c6_59, %c0_60, %c0_61] : memref<10x1x128xf32, #tpu.memory_space<vmem>>, vector<1x1x128xf32>
    %138 = vector.shape_cast %137 : vector<1x1x128xf32> to vector<1x128xf32>
    %139 = arith.truncf %138 : vector<1x128xf32> to vector<1x128xbf16>
    %cst_62 = arith.constant dense<0.000000e+00> : vector<8x128xf32>
    %140 = tpu.matmul %127, %136, %cst_62 {dimension_numbers = #tpu.dot_dimension_numbers<[1], [0], [0], [1], [0, 0, 1, 1], [], []>} : vector<8x128xbf16>, vector<128x128xbf16>, vector<8x128xf32> -> vector<8x128xf32>
    %141 = arith.truncf %140 : vector<8x128xf32> to vector<8x128xbf16>
    %142 = vector.broadcast %139 : vector<1x128xbf16> to vector<8x128xbf16>
    %143 = arith.addf %141, %142 : vector<8x128xbf16>
    %cst_63 = arith.constant 2.001950e-01 : bf16
    %144 = vector.broadcast %cst_63 : bf16 to vector<8x128xbf16>
    %145 = arith.mulf %144, %143 : vector<8x128xbf16>
    %146 = arith.maximumf %143, %145 : vector<8x128xbf16>
    %cst_64 = arith.constant dense<0.000000e+00> : vector<8x128xf32>
    %147 = tpu.matmul %134, %136, %cst_64 {dimension_numbers = #tpu.dot_dimension_numbers<[1], [0], [0], [1], [0, 0, 1, 1], [], []>} : vector<8x128xbf16>, vector<128x128xbf16>, vector<8x128xf32> -> vector<8x128xf32>
    %148 = arith.truncf %147 : vector<8x128xf32> to vector<8x128xbf16>
    %149 = vector.broadcast %139 : vector<1x128xbf16> to vector<8x128xbf16>
    %150 = arith.addf %148, %149 : vector<8x128xbf16>
    %cst_65 = arith.constant 2.001950e-01 : bf16
    %151 = vector.broadcast %cst_65 : bf16 to vector<8x128xbf16>
    %152 = arith.mulf %151, %150 : vector<8x128xbf16>
    %153 = arith.maximumf %150, %152 : vector<8x128xbf16>
    %c7 = arith.constant 7 : index
    %c0_66 = arith.constant 0 : index
    %c0_67 = arith.constant 0 : index
    %154 = vector.load %arg1[%c7, %c0_66, %c0_67] : memref<10x128x128xbf16, #tpu.memory_space<vmem>>, vector<1x128x128xbf16>
    %155 = vector.shape_cast %154 : vector<1x128x128xbf16> to vector<128x128xbf16>
    %c7_68 = arith.constant 7 : index
    %c0_69 = arith.constant 0 : index
    %c0_70 = arith.constant 0 : index
    %156 = vector.load %arg2[%c7_68, %c0_69, %c0_70] : memref<10x1x128xf32, #tpu.memory_space<vmem>>, vector<1x1x128xf32>
    %157 = vector.shape_cast %156 : vector<1x1x128xf32> to vector<1x128xf32>
    %158 = arith.truncf %157 : vector<1x128xf32> to vector<1x128xbf16>
    %cst_71 = arith.constant dense<0.000000e+00> : vector<8x128xf32>
    %159 = tpu.matmul %146, %155, %cst_71 {dimension_numbers = #tpu.dot_dimension_numbers<[1], [0], [0], [1], [0, 0, 1, 1], [], []>} : vector<8x128xbf16>, vector<128x128xbf16>, vector<8x128xf32> -> vector<8x128xf32>
    %160 = arith.truncf %159 : vector<8x128xf32> to vector<8x128xbf16>
    %161 = vector.broadcast %158 : vector<1x128xbf16> to vector<8x128xbf16>
    %162 = arith.addf %160, %161 : vector<8x128xbf16>
    %cst_72 = arith.constant 2.001950e-01 : bf16
    %163 = vector.broadcast %cst_72 : bf16 to vector<8x128xbf16>
    %164 = arith.mulf %163, %162 : vector<8x128xbf16>
    %165 = arith.maximumf %162, %164 : vector<8x128xbf16>
    %cst_73 = arith.constant dense<0.000000e+00> : vector<8x128xf32>
    %166 = tpu.matmul %153, %155, %cst_73 {dimension_numbers = #tpu.dot_dimension_numbers<[1], [0], [0], [1], [0, 0, 1, 1], [], []>} : vector<8x128xbf16>, vector<128x128xbf16>, vector<8x128xf32> -> vector<8x128xf32>
    %167 = arith.truncf %166 : vector<8x128xf32> to vector<8x128xbf16>
    %168 = vector.broadcast %158 : vector<1x128xbf16> to vector<8x128xbf16>
    %169 = arith.addf %167, %168 : vector<8x128xbf16>
    %cst_74 = arith.constant 2.001950e-01 : bf16
    %170 = vector.broadcast %cst_74 : bf16 to vector<8x128xbf16>
    %171 = arith.mulf %170, %169 : vector<8x128xbf16>
    %172 = arith.maximumf %169, %171 : vector<8x128xbf16>
    %c8_75 = arith.constant 8 : index
    %c0_76 = arith.constant 0 : index
    %c0_77 = arith.constant 0 : index
    %173 = vector.load %arg1[%c8_75, %c0_76, %c0_77] : memref<10x128x128xbf16, #tpu.memory_space<vmem>>, vector<1x128x128xbf16>
    %174 = vector.shape_cast %173 : vector<1x128x128xbf16> to vector<128x128xbf16>
    %c8_78 = arith.constant 8 : index
    %c0_79 = arith.constant 0 : index
    %c0_80 = arith.constant 0 : index
    %175 = vector.load %arg2[%c8_78, %c0_79, %c0_80] : memref<10x1x128xf32, #tpu.memory_space<vmem>>, vector<1x1x128xf32>
    %176 = vector.shape_cast %175 : vector<1x1x128xf32> to vector<1x128xf32>
    %177 = arith.truncf %176 : vector<1x128xf32> to vector<1x128xbf16>
    %cst_81 = arith.constant dense<0.000000e+00> : vector<8x128xf32>
    %178 = tpu.matmul %165, %174, %cst_81 {dimension_numbers = #tpu.dot_dimension_numbers<[1], [0], [0], [1], [0, 0, 1, 1], [], []>} : vector<8x128xbf16>, vector<128x128xbf16>, vector<8x128xf32> -> vector<8x128xf32>
    %179 = arith.truncf %178 : vector<8x128xf32> to vector<8x128xbf16>
    %180 = vector.broadcast %177 : vector<1x128xbf16> to vector<8x128xbf16>
    %181 = arith.addf %179, %180 : vector<8x128xbf16>
    %cst_82 = arith.constant 2.001950e-01 : bf16
    %182 = vector.broadcast %cst_82 : bf16 to vector<8x128xbf16>
    %183 = arith.mulf %182, %181 : vector<8x128xbf16>
    %184 = arith.maximumf %181, %183 : vector<8x128xbf16>
    %cst_83 = arith.constant dense<0.000000e+00> : vector<8x128xf32>
    %185 = tpu.matmul %172, %174, %cst_83 {dimension_numbers = #tpu.dot_dimension_numbers<[1], [0], [0], [1], [0, 0, 1, 1], [], []>} : vector<8x128xbf16>, vector<128x128xbf16>, vector<8x128xf32> -> vector<8x128xf32>
    %186 = arith.truncf %185 : vector<8x128xf32> to vector<8x128xbf16>
    %187 = vector.broadcast %177 : vector<1x128xbf16> to vector<8x128xbf16>
    %188 = arith.addf %186, %187 : vector<8x128xbf16>
    %cst_84 = arith.constant 2.001950e-01 : bf16
    %189 = vector.broadcast %cst_84 : bf16 to vector<8x128xbf16>
    %190 = arith.mulf %189, %188 : vector<8x128xbf16>
    %191 = arith.maximumf %188, %190 : vector<8x128xbf16>
    %c9 = arith.constant 9 : index
    %c0_85 = arith.constant 0 : index
    %c0_86 = arith.constant 0 : index
    %192 = vector.load %arg1[%c9, %c0_85, %c0_86] : memref<10x128x128xbf16, #tpu.memory_space<vmem>>, vector<1x128x128xbf16>
    %193 = vector.shape_cast %192 : vector<1x128x128xbf16> to vector<128x128xbf16>
    %c9_87 = arith.constant 9 : index
    %c0_88 = arith.constant 0 : index
    %c0_89 = arith.constant 0 : index
    %194 = vector.load %arg2[%c9_87, %c0_88, %c0_89] : memref<10x1x128xf32, #tpu.memory_space<vmem>>, vector<1x1x128xf32>
    %195 = vector.shape_cast %194 : vector<1x1x128xf32> to vector<1x128xf32>
    %196 = arith.truncf %195 : vector<1x128xf32> to vector<1x128xbf16>
    %cst_90 = arith.constant dense<0.000000e+00> : vector<8x128xf32>
    %197 = tpu.matmul %184, %193, %cst_90 {dimension_numbers = #tpu.dot_dimension_numbers<[1], [0], [0], [1], [0, 0, 1, 1], [], []>} : vector<8x128xbf16>, vector<128x128xbf16>, vector<8x128xf32> -> vector<8x128xf32>
    %198 = arith.truncf %197 : vector<8x128xf32> to vector<8x128xbf16>
    %199 = vector.broadcast %196 : vector<1x128xbf16> to vector<8x128xbf16>
    %200 = arith.addf %198, %199 : vector<8x128xbf16>
    %cst_91 = arith.constant 2.001950e-01 : bf16
    %201 = vector.broadcast %cst_91 : bf16 to vector<8x128xbf16>
    %202 = arith.mulf %201, %200 : vector<8x128xbf16>
    %203 = arith.maximumf %200, %202 : vector<8x128xbf16>
    %cst_92 = arith.constant dense<0.000000e+00> : vector<8x128xf32>
    %204 = tpu.matmul %191, %193, %cst_92 {dimension_numbers = #tpu.dot_dimension_numbers<[1], [0], [0], [1], [0, 0, 1, 1], [], []>} : vector<8x128xbf16>, vector<128x128xbf16>, vector<8x128xf32> -> vector<8x128xf32>
    %205 = arith.truncf %204 : vector<8x128xf32> to vector<8x128xbf16>
    %206 = vector.broadcast %196 : vector<1x128xbf16> to vector<8x128xbf16>
    %207 = arith.addf %205, %206 : vector<8x128xbf16>
    %cst_93 = arith.constant 2.001950e-01 : bf16
    %208 = vector.broadcast %cst_93 : bf16 to vector<8x128xbf16>
    %209 = arith.mulf %208, %207 : vector<8x128xbf16>
    %210 = arith.maximumf %207, %209 : vector<8x128xbf16>
    %211 = vector.extract_strided_slice %203 {offsets = [0, 0], sizes = [8, 1], strides = [1, 1]} : vector<8x128xbf16> to vector<8x1xbf16>
    %212 = arith.extf %211 : vector<8x1xbf16> to vector<8x1xf32>
    %c0_94 = arith.constant 0 : index
    %c0_95 = arith.constant 0 : index
    %213 = vector.load %arg4[%c0_94, %c0_95] : memref<16x1xf32, #tpu.memory_space<vmem>>, vector<8x1xf32>
    tpu.vector_store %arg4[%c0_94, %c0_95], %212 {strides = array<i32>} : memref<16x1xf32, #tpu.memory_space<vmem>>, vector<8x1xf32>,
    %214 = vector.extract_strided_slice %210 {offsets = [0, 0], sizes = [8, 1], strides = [1, 1]} : vector<8x128xbf16> to vector<8x1xbf16>
    %215 = arith.extf %214 : vector<8x1xbf16> to vector<8x1xf32>
    %c8_96 = arith.constant 8 : index
    %c0_97 = arith.constant 0 : index
    %216 = vector.load %arg4[%c8_96, %c0_97] : memref<16x1xf32, #tpu.memory_space<vmem>>, vector<8x1xf32>
    tpu.vector_store %arg4[%c8_96, %c0_97], %215 {strides = array<i32>} : memref<16x1xf32, #tpu.memory_space<vmem>>, vector<8x1xf32>,
    return
  }
  func.func @transform_0(%arg0: i32) -> (i32, i32, i32) {
    %c0_i32 = arith.constant 0 : i32
    %c0_i32_0 = arith.constant 0 : i32
    %c0_i32_1 = arith.constant 0 : i32
    %c0_i32_2 = arith.constant 0 : i32
    return %c0_i32, %c0_i32_0, %c0_i32_1 : i32, i32, i32
  }
  func.func @transform_1(%arg0: i32) -> (i32, i32, i32) {
    %c0_i32 = arith.constant 0 : i32
    %c0_i32_0 = arith.constant 0 : i32
    %c0_i32_1 = arith.constant 0 : i32
    %c0_i32_2 = arith.constant 0 : i32
    return %c0_i32, %c0_i32_0, %c0_i32_1 : i32, i32, i32
  }
  func.func @transform_2(%arg0: i32) -> (i32, i32) {
    %c0_i32 = arith.constant 0 : i32
    %c0_i32_0 = arith.constant 0 : i32
    return %arg0, %c0_i32 : i32, i32
  }
  func.func @transform_3(%arg0: i32) -> (i32, i32) {
    %c0_i32 = arith.constant 0 : i32
    %c0_i32_0 = arith.constant 0 : i32
    return %arg0, %c0_i32 : i32, i32
  }
}

</mosaic_0001>

<llo_original>
// kernel: discriminator_forward.1
$region0: #{discriminator_forward.1}
  #allocation0 [shape = 'u32[]', space=smem, size = 0x4, offset = 0x4, fixed_abs, tag = 'smem constant byte address 0x4 - core index']
  #allocation1 [shape = 'u32[144,128]{1,0:T(1,128)}', space=vmem, size = 0x12000, scoped, tag = 'internal scratch']
  %s0 = inlined_call_operand.hbm [shape: bf16[10,128,128], index: 0, kind: input, shape index: {}]
  %s1 = inlined_call_operand.vmem [shape: f32[10,1,128], index: 1, kind: input, shape index: {}]
  %s2 = inlined_call_operand.vmem [shape: f32[16,2], index: 2, kind: input, shape index: {}]
  %s3 = inlined_call_operand.vmem [shape: f32[16,1], index: 3, kind: output, shape index: {}]
  %s4 = sld [smem:[#allocation0]]
  $region26: #{discriminator_forward.1} parent=0
    _
  %s6 = ssub.s32 1, %s4
  %s7 = scalar_select 0, %s6, %s4
  $region1: #{discriminator_forward.1} parent=0
    #allocation2 [shape = 'u8[327680]{0}', space=vmem, size = 0x50000, scoped, tag = 'input window, operand 0, single buffered']
    #allocation3 [shape = 's32[1]{0}', space=sflag, size = 0x4, scoped, tag = 'scoped memory for discriminator_forward.1']
    %8 = vsyncpa [#allocation3], 0
    // Predicated region
    $region2: #{discriminator_forward.1} parent=1 // pred_check
      _
    $region3: #{discriminator_forward.1} parent=1 // pred_check_branch
      %10 = sbr.rel (0) target = $region5
    $region4: #{discriminator_forward.1} parent=1 // pred_region
      %s12 = ssub.s32 10240, 10240
      %13 = vsyncadd [#allocation3], %s12
      %s14 = sshll.u32 [#allocation2], 4
      %s15 = int_to_ptr.vmem [resolvable:$true] %s14
      %20 = dma.hbm_to_vmem [thread:$0]  %s0, 10240, %s15, [#allocation3], 64, 64, 4
    $region5: #{discriminator_forward.1} parent=1 // pred_fallthru
      _
    // Predicated region
    $region6: #{discriminator_forward.1} parent=1 // pred_check
      _
    $region7: #{discriminator_forward.1} parent=1 // pred_check_branch
      %22 = sbr.rel (0) target = $region9
    $region8: #{discriminator_forward.1} parent=1 // pred_region
      _
    $region9: #{discriminator_forward.1} parent=1 // pred_fallthru
      _
    // Predicated region
    $region10: #{discriminator_forward.1} parent=1 // pred_check
      _
    $region11: #{discriminator_forward.1} parent=1 // pred_check_branch
      %24 = sbr.rel (0) target = $region13
    $region12: #{discriminator_forward.1} parent=1 // pred_region
      _
    $region13: #{discriminator_forward.1} parent=1 // pred_fallthru
      _
    // Predicated region
    $region14: #{discriminator_forward.1} parent=1 // pred_check
      _
    $region15: #{discriminator_forward.1} parent=1 // pred_check_branch
      %26 = sbr.rel (0) target = $region17
    $region16: #{discriminator_forward.1} parent=1 // pred_region
      %27 = dma.done [#allocation3], 10240
    $region17: #{discriminator_forward.1} parent=1 // pred_fallthru
      _
    %v30 = vld [vmem:[#allocation2] sm:$0x1]
    %v31 = vunpack.c.l.bf16 %v30
    %v32 = vld [vmem:[%s1] sm:$0x1]
    %v33 = vld [vmem:[%s2] sm:$0xff]
    %35 = vset.pattern.permute.xlu0 0
    %36 = vperm.xlu0 %35, %v33
    %v37 = vpop.permute.xlu0 %36
    %v39 = vlaneseq
    %v40 = vshrl.u32 %v39, 7
    %v41 = vsub.s32 0, %v40
    %v42 = vrot.slane %v31, %v41
    %v43 = vmul.f32 %v37, %v42
    %44 = vset.pattern.permute.xlu0 1
    %45 = vperm.xlu0 %44, %v33
    %v46 = vpop.permute.xlu0 %45
    %v48 = vlaneseq
    %v49 = vshrl.u32 %v48, 7
    %v50 = vsub.s32 1, %v49
    %v51 = vrot.slane %v31, %v50
    %v52 = vmul.f32 %v46, %v51
    %v53 = vadd.f32 %v43, %v52
    %v55 = vlaneseq
    %v56 = vshrl.u32 %v55, 7
    %v57 = vsub.s32 0, %v56
    %v58 = vrot.slane %v32, %v57
    %v60 = vadd.f32 %v53, %v58
    %v61 = vmul.f32 %v60, 0.2
    %v62 = vmax.f32 %v60, %v61
    %v63 = vpack.c.bf16 %v62, %v62
    %v64 = vld [vmem:[%s2 + $0x8] sm:$0xff]
    %66 = vset.pattern.permute.xlu0 0
    %67 = vperm.xlu0 %66, %v64
    %v68 = vpop.permute.xlu0 %67
    %v70 = vmul.f32 %v68, %v42
    %71 = vset.pattern.permute.xlu0 1
    %72 = vperm.xlu0 %71, %v64
    %v73 = vpop.permute.xlu0 %72
    %v75 = vmul.f32 %v73, %v51
    %v76 = vadd.f32 %v70, %v75
    %v77 = vadd.f32 %v76, %v58
    %v78 = vmul.f32 %v77, 0.2
    %v79 = vmax.f32 %v77, %v78
    %v80 = vpack.c.bf16 %v79, %v79
    %s81 = scalar_lea.vmem [#allocation2], 64
    %v82 = vld [vmem:[%s81] sm:$0xf]
    %v83 = vld [vmem:[%s81 + $0x4] sm:$0xf]
    %v84 = vld [vmem:[%s81 + $0x8] sm:$0xf]
    %v85 = vld [vmem:[%s81 + $0xc] sm:$0xf]
    %v86 = vld [vmem:[%s81 + $0x10] sm:$0xf]
    %v87 = vld [vmem:[%s81 + $0x14] sm:$0xf]
    %v88 = vld [vmem:[%s81 + $0x18] sm:$0xf]
    %v89 = vld [vmem:[%s81 + $0x1c] sm:$0xf]
    %v90 = vld [vmem:[%s81 + $0x20] sm:$0xf]
    %v91 = vld [vmem:[%s81 + $0x24] sm:$0xf]
    %v92 = vld [vmem:[%s81 + $0x28] sm:$0xf]
    %v93 = vld [vmem:[%s81 + $0x2c] sm:$0xf]
    %v94 = vld [vmem:[%s81 + $0x30] sm:$0xf]
    %v95 = vld [vmem:[%s81 + $0x34] sm:$0xf]
    %v96 = vld [vmem:[%s81 + $0x38] sm:$0xf]
    %v97 = vld [vmem:[%s81 + $0x3c] sm:$0xf]
    %s98 = scalar_lea.vmem %s1, 1
    %v99 = vld [vmem:[%s98] sm:$0x1]
    %v100 = vpack.c.bf16 %v99, %v99
    %v117 = vunpack.c.l.b16 %v82
    %v118 = vunpack.c.l.b16 %v83
    %v119 = vunpack.c.l.b16 %v84
    %v120 = vunpack.c.l.b16 %v85
    %v121 = vunpack.c.l.b16 %v86
    %v122 = vunpack.c.l.b16 %v87
    %v123 = vunpack.c.l.b16 %v88
    %v124 = vunpack.c.l.b16 %v89
    %v125 = vunpack.c.l.b16 %v90
    %v126 = vunpack.c.l.b16 %v91
    %v127 = vunpack.c.l.b16 %v92
    %v128 = vunpack.c.l.b16 %v93
    %v129 = vunpack.c.l.b16 %v94
    %v130 = vunpack.c.l.b16 %v95
    %v131 = vunpack.c.l.b16 %v96
    %v132 = vunpack.c.l.b16 %v97
    %v133 = vpack.c.b16 %v118, %v117
    %v134 = vpack.c.b16 %v120, %v119
    %v135 = vpack.c.b16 %v122, %v121
    %v136 = vpack.c.b16 %v124, %v123
    %v137 = vpack.c.b16 %v126, %v125
    %v138 = vpack.c.b16 %v128, %v127
    %v139 = vpack.c.b16 %v130, %v129
    %v140 = vpack.c.b16 %v132, %v131
    %149 = vmatprep.subr.bf16.mxu0 0
    %150 = vmatpush1.bf16.msra.mxu0 %v133
    %151 = vmatprep.subr.bf16.mxu0 0
    %152 = vmatpush1.bf16.msra.mxu0 %v134
    %153 = vmatprep.subr.bf16.mxu0 0
    %154 = vmatpush1.bf16.msra.mxu0 %v135
    %155 = vmatprep.subr.bf16.mxu0 0
    %156 = vmatpush1.bf16.msra.mxu0 %v136
    %157 = vmatprep.subr.bf16.mxu0 0
    %158 = vmatpush1.bf16.msra.mxu0 %v137
    %159 = vmatprep.subr.bf16.mxu0 0
    %160 = vmatpush1.bf16.msra.mxu0 %v138
    %161 = vmatprep.subr.bf16.mxu0 0
    %162 = vmatpush1.bf16.msra.mxu0 %v139
    %163 = vmatprep.subr.bf16.mxu0 0
    %164 = vmatpush1.bf16.msra.mxu0 %v140
    %165 = vmatprep.subr.bf16.mxu0 0
    %166 = vmatpush1.bf16.msra.mxu0 0
    %167 = vmatprep.subr.bf16.mxu0 0
    %168 = vmatpush1.bf16.msra.mxu0 0
    %169 = vmatprep.subr.bf16.mxu0 0
    %170 = vmatpush1.bf16.msra.mxu0 0
    %171 = vmatprep.subr.bf16.mxu0 0
    %172 = vmatpush1.bf16.msra.mxu0 0
    %173 = vmatprep.subr.bf16.mxu0 0
    %174 = vmatpush1.bf16.msra.mxu0 0
    %175 = vmatprep.subr.bf16.mxu0 0
    %176 = vmatpush1.bf16.msra.mxu0 0
    %177 = vmatprep.subr.bf16.mxu0 0
    %178 = vmatpush1.bf16.msra.mxu0 0
    %179 = vmatprep.subr.bf16.mxu0 0
    %180 = vmatpush1.bf16.msra.mxu0 0
    %181 = vmatprep.mubr.bf16.mxu0 0
    %182 = vmatmul.mubr.bf16.gmra.mrb[0].mxu0 %v63
    %v183 = vpop.f32.mrb[0].mxu0
    %v184 = vadd.f32 0.0, %v183
    %v185 = vpop.f32.mrb[0].mxu0
    %v186 = vpop.f32.mrb[0].mxu0
    %v187 = vpop.f32.mrb[0].mxu0
    %188 = vdwg.mxu0
    %v189 = vpack.c.bf16 %v184, %v184
    %v191 = vpack.i.b16 %v100, %v100
    %v193 = vlaneseq
    %v194 = vshrl.u32 %v193, 7
    %v195 = vsub.s32 0, %v194
    %v196 = vrot.slane %v191, %v195
    %v197 = vadd.bf16 %v189, %v196
    %v198 = vmul.bf16 %v197, 1045249613
    %v199 = vmax.bf16 %v197, %v198
    %200 = vmatprep.subr.bf16.mxu0 0
    %201 = vmatpush1.bf16.msra.mxu0 %v133
    %202 = vmatprep.subr.bf16.mxu0 0
    %203 = vmatpush1.bf16.msra.mxu0 %v134
    %204 = vmatprep.subr.bf16.mxu0 0
    %205 = vmatpush1.bf16.msra.mxu0 %v135
    %206 = vmatprep.subr.bf16.mxu0 0
    %207 = vmatpush1.bf16.msra.mxu0 %v136
    %208 = vmatprep.subr.bf16.mxu0 0
    %209 = vmatpush1.bf16.msra.mxu0 %v137
    %210 = vmatprep.subr.bf16.mxu0 0
    %211 = vmatpush1.bf16.msra.mxu0 %v138
    %212 = vmatprep.subr.bf16.mxu0 0
    %213 = vmatpush1.bf16.msra.mxu0 %v139
    %214 = vmatprep.subr.bf16.mxu0 0
    %215 = vmatpush1.bf16.msra.mxu0 %v140
    %216 = vmatprep.subr.bf16.mxu0 0
    %217 = vmatpush1.bf16.msra.mxu0 0
    %218 = vmatprep.subr.bf16.mxu0 0
    %219 = vmatpush1.bf16.msra.mxu0 0
    %220 = vmatprep.subr.bf16.mxu0 0
    %221 = vmatpush1.bf16.msra.mxu0 0
    %222 = vmatprep.subr.bf16.mxu0 0
    %223 = vmatpush1.bf16.msra.mxu0 0
    %224 = vmatprep.subr.bf16.mxu0 0
    %225 = vmatpush1.bf16.msra.mxu0 0
    %226 = vmatprep.subr.bf16.mxu0 0
    %227 = vmatpush1.bf16.msra.mxu0 0
    %228 = vmatprep.subr.bf16.mxu0 0
    %229 = vmatpush1.bf16.msra.mxu0 0
    %230 = vmatprep.subr.bf16.mxu0 0
    %231 = vmatpush1.bf16.msra.mxu0 0
    %232 = vmatprep.mubr.bf16.mxu0 0
    %233 = vmatmul.mubr.bf16.gmra.mrb[0].mxu0 %v80
    %v234 = vpop.f32.mrb[0].mxu0
    %v235 = vadd.f32 0.0, %v234
    %v236 = vpop.f32.mrb[0].mxu0
    %v237 = vpop.f32.mrb[0].mxu0
    %v238 = vpop.f32.mrb[0].mxu0
    %239 = vdwg.mxu0
    %v240 = vpack.c.bf16 %v235, %v235
    %v241 = vadd.bf16 %v240, %v196
    %v242 = vmul.bf16 %v241, 1045249613
    %v243 = vmax.bf16 %v241, %v242
    %s244 = scalar_lea.vmem [#allocation2], 128
    %v245 = vld [vmem:[%s244] sm:$0xf]
    %v246 = vld [vmem:[%s244 + $0x4] sm:$0xf]
    %v247 = vld [vmem:[%s244 + $0x8] sm:$0xf]
    %v248 = vld [vmem:[%s244 + $0xc] sm:$0xf]
    %v249 = vld [vmem:[%s244 + $0x10] sm:$0xf]
    %v250 = vld [vmem:[%s244 + $0x14] sm:$0xf]
    %v251 = vld [vmem:[%s244 + $0x18] sm:$0xf]
    %v252 = vld [vmem:[%s244 + $0x1c] sm:$0xf]
    %v253 = vld [vmem:[%s244 + $0x20] sm:$0xf]
    %v254 = vld [vmem:[%s244 + $0x24] sm:$0xf]
    %v255 = vld [vmem:[%s244 + $0x28] sm:$0xf]
    %v256 = vld [vmem:[%s244 + $0x2c] sm:$0xf]
    %v257 = vld [vmem:[%s244 + $0x30] sm:$0xf]
    %v258 = vld [vmem:[%s244 + $0x34] sm:$0xf]
    %v259 = vld [vmem:[%s244 + $0x38] sm:$0xf]
    %v260 = vld [vmem:[%s244 + $0x3c] sm:$0xf]
    %s261 = scalar_lea.vmem %s1, 2
    %v262 = vld [vmem:[%s261] sm:$0x1]
    %v263 = vpack.c.bf16 %v262, %v262
    %v280 = vunpack.c.l.b16 %v245
    %v281 = vunpack.c.l.b16 %v246
    %v282 = vunpack.c.l.b16 %v247
    %v283 = vunpack.c.l.b16 %v248
    %v284 = vunpack.c.l.b16 %v249
    %v285 = vunpack.c.l.b16 %v250
    %v286 = vunpack.c.l.b16 %v251
    %v287 = vunpack.c.l.b16 %v252
    %v288 = vunpack.c.l.b16 %v253
    %v289 = vunpack.c.l.b16 %v254
    %v290 = vunpack.c.l.b16 %v255
    %v291 = vunpack.c.l.b16 %v256
    %v292 = vunpack.c.l.b16 %v257
    %v293 = vunpack.c.l.b16 %v258
    %v294 = vunpack.c.l.b16 %v259
    %v295 = vunpack.c.l.b16 %v260
    %v296 = vpack.c.b16 %v281, %v280
    %v297 = vpack.c.b16 %v283, %v282
    %v298 = vpack.c.b16 %v285, %v284
    %v299 = vpack.c.b16 %v287, %v286
    %v300 = vpack.c.b16 %v289, %v288
    %v301 = vpack.c.b16 %v291, %v290
    %v302 = vpack.c.b16 %v293, %v292
    %v303 = vpack.c.b16 %v295, %v294
    %312 = vmatprep.subr.bf16.mxu0 0
    %313 = vmatpush1.bf16.msra.mxu0 %v296
    %314 = vmatprep.subr.bf16.mxu0 0
    %315 = vmatpush1.bf16.msra.mxu0 %v297
    %316 = vmatprep.subr.bf16.mxu0 0
    %317 = vmatpush1.bf16.msra.mxu0 %v298
    %318 = vmatprep.subr.bf16.mxu0 0
    %319 = vmatpush1.bf16.msra.mxu0 %v299
    %320 = vmatprep.subr.bf16.mxu0 0
    %321 = vmatpush1.bf16.msra.mxu0 %v300
    %322 = vmatprep.subr.bf16.mxu0 0
    %323 = vmatpush1.bf16.msra.mxu0 %v301
    %324 = vmatprep.subr.bf16.mxu0 0
    %325 = vmatpush1.bf16.msra.mxu0 %v302
    %326 = vmatprep.subr.bf16.mxu0 0
    %327 = vmatpush1.bf16.msra.mxu0 %v303
    %328 = vmatprep.subr.bf16.mxu0 0
    %329 = vmatpush1.bf16.msra.mxu0 0
    %330 = vmatprep.subr.bf16.mxu0 0
    %331 = vmatpush1.bf16.msra.mxu0 0
    %332 = vmatprep.subr.bf16.mxu0 0
    %333 = vmatpush1.bf16.msra.mxu0 0
    %334 = vmatprep.subr.bf16.mxu0 0
    %335 = vmatpush1.bf16.msra.mxu0 0
    %336 = vmatprep.subr.bf16.mxu0 0
    %337 = vmatpush1.bf16.msra.mxu0 0
    %338 = vmatprep.subr.bf16.mxu0 0
    %339 = vmatpush1.bf16.msra.mxu0 0
    %340 = vmatprep.subr.bf16.mxu0 0
    %341 = vmatpush1.bf16.msra.mxu0 0
    %342 = vmatprep.subr.bf16.mxu0 0
    %343 = vmatpush1.bf16.msra.mxu0 0
    %344 = vmatprep.mubr.bf16.mxu0 0
    %345 = vmatmul.mubr.bf16.gmra.mrb[0].mxu0 %v199
    %v346 = vpop.f32.mrb[0].mxu0
    %v347 = vadd.f32 0.0, %v346
    %v348 = vpop.f32.mrb[0].mxu0
    %v349 = vpop.f32.mrb[0].mxu0
    %v350 = vpop.f32.mrb[0].mxu0
    %351 = vdwg.mxu0
    %v352 = vpack.c.bf16 %v347, %v347
    %v354 = vpack.i.b16 %v263, %v263
    %v356 = vlaneseq
    %v357 = vshrl.u32 %v356, 7
    %v358 = vsub.s32 0, %v357
    %v359 = vrot.slane %v354, %v358
    %v360 = vadd.bf16 %v352, %v359
    %v361 = vmul.bf16 %v360, 1045249613
    %v362 = vmax.bf16 %v360, %v361
    %363 = vmatprep.subr.bf16.mxu0 0
    %364 = vmatpush1.bf16.msra.mxu0 %v296
    %365 = vmatprep.subr.bf16.mxu0 0
    %366 = vmatpush1.bf16.msra.mxu0 %v297
    %367 = vmatprep.subr.bf16.mxu0 0
    %368 = vmatpush1.bf16.msra.mxu0 %v298
    %369 = vmatprep.subr.bf16.mxu0 0
    %370 = vmatpush1.bf16.msra.mxu0 %v299
    %371 = vmatprep.subr.bf16.mxu0 0
    %372 = vmatpush1.bf16.msra.mxu0 %v300
    %373 = vmatprep.subr.bf16.mxu0 0
    %374 = vmatpush1.bf16.msra.mxu0 %v301
    %375 = vmatprep.subr.bf16.mxu0 0
    %376 = vmatpush1.bf16.msra.mxu0 %v302
    %377 = vmatprep.subr.bf16.mxu0 0
    %378 = vmatpush1.bf16.msra.mxu0 %v303
    %379 = vmatprep.subr.bf16.mxu0 0
    %380 = vmatpush1.bf16.msra.mxu0 0
    %381 = vmatprep.subr.bf16.mxu0 0
    %382 = vmatpush1.bf16.msra.mxu0 0
    %383 = vmatprep.subr.bf16.mxu0 0
    %384 = vmatpush1.bf16.msra.mxu0 0
    %385 = vmatprep.subr.bf16.mxu0 0
    %386 = vmatpush1.bf16.msra.mxu0 0
    %387 = vmatprep.subr.bf16.mxu0 0
    %388 = vmatpush1.bf16.msra.mxu0 0
    %389 = vmatprep.subr.bf16.mxu0 0
    %390 = vmatpush1.bf16.msra.mxu0 0
    %391 = vmatprep.subr.bf16.mxu0 0
    %392 = vmatpush1.bf16.msra.mxu0 0
    %393 = vmatprep.subr.bf16.mxu0 0
    %394 = vmatpush1.bf16.msra.mxu0 0
    %395 = vmatprep.mubr.bf16.mxu0 0
    %396 = vmatmul.mubr.bf16.gmra.mrb[0].mxu0 %v243
    %v397 = vpop.f32.mrb[0].mxu0
    %v398 = vadd.f32 0.0, %v397
    %v399 = vpop.f32.mrb[0].mxu0
    %v400 = vpop.f32.mrb[0].mxu0
    %v401 = vpop.f32.mrb[0].mxu0
    %402 = vdwg.mxu0
    %v403 = vpack.c.bf16 %v398, %v398
    %v404 = vadd.bf16 %v403, %v359
    %v405 = vmul.bf16 %v404, 1045249613
    %v406 = vmax.bf16 %v404, %v405
    %s407 = scalar_lea.vmem [#allocation2], 192
    %v408 = vld [vmem:[%s407] sm:$0xf]
    %v409 = vld [vmem:[%s407 + $0x4] sm:$0xf]
    %v410 = vld [vmem:[%s407 + $0x8] sm:$0xf]
    %v411 = vld [vmem:[%s407 + $0xc] sm:$0xf]
    %v412 = vld [vmem:[%s407 + $0x10] sm:$0xf]
    %v413 = vld [vmem:[%s407 + $0x14] sm:$0xf]
    %v414 = vld [vmem:[%s407 + $0x18] sm:$0xf]
    %v415 = vld [vmem:[%s407 + $0x1c] sm:$0xf]
    %v416 = vld [vmem:[%s407 + $0x20] sm:$0xf]
    %v417 = vld [vmem:[%s407 + $0x24] sm:$0xf]
    %v418 = vld [vmem:[%s407 + $0x28] sm:$0xf]
    %v419 = vld [vmem:[%s407 + $0x2c] sm:$0xf]
    %v420 = vld [vmem:[%s407 + $0x30] sm:$0xf]
    %v421 = vld [vmem:[%s407 + $0x34] sm:$0xf]
    %v422 = vld [vmem:[%s407 + $0x38] sm:$0xf]
    %v423 = vld [vmem:[%s407 + $0x3c] sm:$0xf]
    %s424 = scalar_lea.vmem %s1, 3
    %v425 = vld [vmem:[%s424] sm:$0x1]
    %v426 = vpack.c.bf16 %v425, %v425
    %v443 = vunpack.c.l.b16 %v408
    %v444 = vunpack.c.l.b16 %v409
    %v445 = vunpack.c.l.b16 %v410
    %v446 = vunpack.c.l.b16 %v411
    %v447 = vunpack.c.l.b16 %v412
    %v448 = vunpack.c.l.b16 %v413
    %v449 = vunpack.c.l.b16 %v414
    %v450 = vunpack.c.l.b16 %v415
    %v451 = vunpack.c.l.b16 %v416
    %v452 = vunpack.c.l.b16 %v417
    %v453 = vunpack.c.l.b16 %v418
    %v454 = vunpack.c.l.b16 %v419
    %v455 = vunpack.c.l.b16 %v420
    %v456 = vunpack.c.l.b16 %v421
    %v457 = vunpack.c.l.b16 %v422
    %v458 = vunpack.c.l.b16 %v423
    %v459 = vpack.c.b16 %v444, %v443
    %v460 = vpack.c.b16 %v446, %v445
    %v461 = vpack.c.b16 %v448, %v447
    %v462 = vpack.c.b16 %v450, %v449
    %v463 = vpack.c.b16 %v452, %v451
    %v464 = vpack.c.b16 %v454, %v453
    %v465 = vpack.c.b16 %v456, %v455
    %v466 = vpack.c.b16 %v458, %v457
    %475 = vmatprep.subr.bf16.mxu0 0
    %476 = vmatpush1.bf16.msra.mxu0 %v459
    %477 = vmatprep.subr.bf16.mxu0 0
    %478 = vmatpush1.bf16.msra.mxu0 %v460
    %479 = vmatprep.subr.bf16.mxu0 0
    %480 = vmatpush1.bf16.msra.mxu0 %v461
    %481 = vmatprep.subr.bf16.mxu0 0
    %482 = vmatpush1.bf16.msra.mxu0 %v462
    %483 = vmatprep.subr.bf16.mxu0 0
    %484 = vmatpush1.bf16.msra.mxu0 %v463
    %485 = vmatprep.subr.bf16.mxu0 0
    %486 = vmatpush1.bf16.msra.mxu0 %v464
    %487 = vmatprep.subr.bf16.mxu0 0
    %488 = vmatpush1.bf16.msra.mxu0 %v465
    %489 = vmatprep.subr.bf16.mxu0 0
    %490 = vmatpush1.bf16.msra.mxu0 %v466
    %491 = vmatprep.subr.bf16.mxu0 0
    %492 = vmatpush1.bf16.msra.mxu0 0
    %493 = vmatprep.subr.bf16.mxu0 0
    %494 = vmatpush1.bf16.msra.mxu0 0
    %495 = vmatprep.subr.bf16.mxu0 0
    %496 = vmatpush1.bf16.msra.mxu0 0
    %497 = vmatprep.subr.bf16.mxu0 0
    %498 = vmatpush1.bf16.msra.mxu0 0
    %499 = vmatprep.subr.bf16.mxu0 0
    %500 = vmatpush1.bf16.msra.mxu0 0
    %501 = vmatprep.subr.bf16.mxu0 0
    %502 = vmatpush1.bf16.msra.mxu0 0
    %503 = vmatprep.subr.bf16.mxu0 0
    %504 = vmatpush1.bf16.msra.mxu0 0
    %505 = vmatprep.subr.bf16.mxu0 0
    %506 = vmatpush1.bf16.msra.mxu0 0
    %507 = vmatprep.mubr.bf16.mxu0 0
    %508 = vmatmul.mubr.bf16.gmra.mrb[0].mxu0 %v362
    %v509 = vpop.f32.mrb[0].mxu0
    %v510 = vadd.f32 0.0, %v509
    %v511 = vpop.f32.mrb[0].mxu0
    %v512 = vpop.f32.mrb[0].mxu0
    %v513 = vpop.f32.mrb[0].mxu0
    %514 = vdwg.mxu0
    %v515 = vpack.c.bf16 %v510, %v510
    %v517 = vpack.i.b16 %v426, %v426
    %v519 = vlaneseq
    %v520 = vshrl.u32 %v519, 7
    %v521 = vsub.s32 0, %v520
    %v522 = vrot.slane %v517, %v521
    %v523 = vadd.bf16 %v515, %v522
    %v524 = vmul.bf16 %v523, 1045249613
    %v525 = vmax.bf16 %v523, %v524
    %526 = vmatprep.subr.bf16.mxu0 0
    %527 = vmatpush1.bf16.msra.mxu0 %v459
    %528 = vmatprep.subr.bf16.mxu0 0
    %529 = vmatpush1.bf16.msra.mxu0 %v460
    %530 = vmatprep.subr.bf16.mxu0 0
    %531 = vmatpush1.bf16.msra.mxu0 %v461
    %532 = vmatprep.subr.bf16.mxu0 0
    %533 = vmatpush1.bf16.msra.mxu0 %v462
    %534 = vmatprep.subr.bf16.mxu0 0
    %535 = vmatpush1.bf16.msra.mxu0 %v463
    %536 = vmatprep.subr.bf16.mxu0 0
    %537 = vmatpush1.bf16.msra.mxu0 %v464
    %538 = vmatprep.subr.bf16.mxu0 0
    %539 = vmatpush1.bf16.msra.mxu0 %v465
    %540 = vmatprep.subr.bf16.mxu0 0
    %541 = vmatpush1.bf16.msra.mxu0 %v466
    %542 = vmatprep.subr.bf16.mxu0 0
    %543 = vmatpush1.bf16.msra.mxu0 0
    %544 = vmatprep.subr.bf16.mxu0 0
    %545 = vmatpush1.bf16.msra.mxu0 0
    %546 = vmatprep.subr.bf16.mxu0 0
    %547 = vmatpush1.bf16.msra.mxu0 0
    %548 = vmatprep.subr.bf16.mxu0 0
    %549 = vmatpush1.bf16.msra.mxu0 0
    %550 = vmatprep.subr.bf16.mxu0 0
    %551 = vmatpush1.bf16.msra.mxu0 0
    %552 = vmatprep.subr.bf16.mxu0 0
    %553 = vmatpush1.bf16.msra.mxu0 0
    %554 = vmatprep.subr.bf16.mxu0 0
    %555 = vmatpush1.bf16.msra.mxu0 0
    %556 = vmatprep.subr.bf16.mxu0 0
    %557 = vmatpush1.bf16.msra.mxu0 0
    %558 = vmatprep.mubr.bf16.mxu0 0
    %559 = vmatmul.mubr.bf16.gmra.mrb[0].mxu0 %v406
    %v560 = vpop.f32.mrb[0].mxu0
    %v561 = vadd.f32 0.0, %v560
    %v562 = vpop.f32.mrb[0].mxu0
    %v563 = vpop.f32.mrb[0].mxu0
    %v564 = vpop.f32.mrb[0].mxu0
    %565 = vdwg.mxu0
    %v566 = vpack.c.bf16 %v561, %v561
    %v567 = vadd.bf16 %v566, %v522
    %v568 = vmul.bf16 %v567, 1045249613
    %v569 = vmax.bf16 %v567, %v568
    %s570 = scalar_lea.vmem [#allocation2], 256
    %v571 = vld [vmem:[%s570] sm:$0xf]
    %v572 = vld [vmem:[%s570 + $0x4] sm:$0xf]
    %v573 = vld [vmem:[%s570 + $0x8] sm:$0xf]
    %v574 = vld [vmem:[%s570 + $0xc] sm:$0xf]
    %v575 = vld [vmem:[%s570 + $0x10] sm:$0xf]
    %v576 = vld [vmem:[%s570 + $0x14] sm:$0xf]
    %v577 = vld [vmem:[%s570 + $0x18] sm:$0xf]
    %v578 = vld [vmem:[%s570 + $0x1c] sm:$0xf]
    %v579 = vld [vmem:[%s570 + $0x20] sm:$0xf]
    %v580 = vld [vmem:[%s570 + $0x24] sm:$0xf]
    %v581 = vld [vmem:[%s570 + $0x28] sm:$0xf]
    %v582 = vld [vmem:[%s570 + $0x2c] sm:$0xf]
    %v583 = vld [vmem:[%s570 + $0x30] sm:$0xf]
    %v584 = vld [vmem:[%s570 + $0x34] sm:$0xf]
    %v585 = vld [vmem:[%s570 + $0x38] sm:$0xf]
    %v586 = vld [vmem:[%s570 + $0x3c] sm:$0xf]
    %s587 = scalar_lea.vmem %s1, 4
    %v588 = vld [vmem:[%s587] sm:$0x1]
    %v589 = vpack.c.bf16 %v588, %v588
    %v606 = vunpack.c.l.b16 %v571
    %v607 = vunpack.c.l.b16 %v572
    %v608 = vunpack.c.l.b16 %v573
    %v609 = vunpack.c.l.b16 %v574
    %v610 = vunpack.c.l.b16 %v575
    %v611 = vunpack.c.l.b16 %v576
    %v612 = vunpack.c.l.b16 %v577
    %v613 = vunpack.c.l.b16 %v578
    %v614 = vunpack.c.l.b16 %v579
    %v615 = vunpack.c.l.b16 %v580
    %v616 = vunpack.c.l.b16 %v581
    %v617 = vunpack.c.l.b16 %v582
    %v618 = vunpack.c.l.b16 %v583
    %v619 = vunpack.c.l.b16 %v584
    %v620 = vunpack.c.l.b16 %v585
    %v621 = vunpack.c.l.b16 %v586
    %v622 = vpack.c.b16 %v607, %v606
    %v623 = vpack.c.b16 %v609, %v608
    %v624 = vpack.c.b16 %v611, %v610
    %v625 = vpack.c.b16 %v613, %v612
    %v626 = vpack.c.b16 %v615, %v614
    %v627 = vpack.c.b16 %v617, %v616
    %v628 = vpack.c.b16 %v619, %v618
    %v629 = vpack.c.b16 %v621, %v620
    %638 = vmatprep.subr.bf16.mxu0 0
    %639 = vmatpush1.bf16.msra.mxu0 %v622
    %640 = vmatprep.subr.bf16.mxu0 0
    %641 = vmatpush1.bf16.msra.mxu0 %v623
    %642 = vmatprep.subr.bf16.mxu0 0
    %643 = vmatpush1.bf16.msra.mxu0 %v624
    %644 = vmatprep.subr.bf16.mxu0 0
    %645 = vmatpush1.bf16.msra.mxu0 %v625
    %646 = vmatprep.subr.bf16.mxu0 0
    %647 = vmatpush1.bf16.msra.mxu0 %v626
    %648 = vmatprep.subr.bf16.mxu0 0
    %649 = vmatpush1.bf16.msra.mxu0 %v627
    %650 = vmatprep.subr.bf16.mxu0 0
    %651 = vmatpush1.bf16.msra.mxu0 %v628
    %652 = vmatprep.subr.bf16.mxu0 0
    %653 = vmatpush1.bf16.msra.mxu0 %v629
    %654 = vmatprep.subr.bf16.mxu0 0
    %655 = vmatpush1.bf16.msra.mxu0 0
    %656 = vmatprep.subr.bf16.mxu0 0
    %657 = vmatpush1.bf16.msra.mxu0 0
    %658 = vmatprep.subr.bf16.mxu0 0
    %659 = vmatpush1.bf16.msra.mxu0 0
    %660 = vmatprep.subr.bf16.mxu0 0
    %661 = vmatpush1.bf16.msra.mxu0 0
    %662 = vmatprep.subr.bf16.mxu0 0
    %663 = vmatpush1.bf16.msra.mxu0 0
    %664 = vmatprep.subr.bf16.mxu0 0
    %665 = vmatpush1.bf16.msra.mxu0 0
    %666 = vmatprep.subr.bf16.mxu0 0
    %667 = vmatpush1.bf16.msra.mxu0 0
    %668 = vmatprep.subr.bf16.mxu0 0
    %669 = vmatpush1.bf16.msra.mxu0 0
    %670 = vmatprep.mubr.bf16.mxu0 0
    %671 = vmatmul.mubr.bf16.gmra.mrb[0].mxu0 %v525
    %v672 = vpop.f32.mrb[0].mxu0
    %v673 = vadd.f32 0.0, %v672
    %v674 = vpop.f32.mrb[0].mxu0
    %v675 = vpop.f32.mrb[0].mxu0
    %v676 = vpop.f32.mrb[0].mxu0
    %677 = vdwg.mxu0
    %v678 = vpack.c.bf16 %v673, %v673
    %v680 = vpack.i.b16 %v589, %v589
    %v682 = vlaneseq
    %v683 = vshrl.u32 %v682, 7
    %v684 = vsub.s32 0, %v683
    %v685 = vrot.slane %v680, %v684
    %v686 = vadd.bf16 %v678, %v685
    %v687 = vmul.bf16 %v686, 1045249613
    %v688 = vmax.bf16 %v686, %v687
    %689 = vmatprep.subr.bf16.mxu0 0
    %690 = vmatpush1.bf16.msra.mxu0 %v622
    %691 = vmatprep.subr.bf16.mxu0 0
    %692 = vmatpush1.bf16.msra.mxu0 %v623
    %693 = vmatprep.subr.bf16.mxu0 0
    %694 = vmatpush1.bf16.msra.mxu0 %v624
    %695 = vmatprep.subr.bf16.mxu0 0
    %696 = vmatpush1.bf16.msra.mxu0 %v625
    %697 = vmatprep.subr.bf16.mxu0 0
    %698 = vmatpush1.bf16.msra.mxu0 %v626
    %699 = vmatprep.subr.bf16.mxu0 0
    %700 = vmatpush1.bf16.msra.mxu0 %v627
    %701 = vmatprep.subr.bf16.mxu0 0
    %702 = vmatpush1.bf16.msra.mxu0 %v628
    %703 = vmatprep.subr.bf16.mxu0 0
    %704 = vmatpush1.bf16.msra.mxu0 %v629
    %705 = vmatprep.subr.bf16.mxu0 0
    %706 = vmatpush1.bf16.msra.mxu0 0
    %707 = vmatprep.subr.bf16.mxu0 0
    %708 = vmatpush1.bf16.msra.mxu0 0
    %709 = vmatprep.subr.bf16.mxu0 0
    %710 = vmatpush1.bf16.msra.mxu0 0
    %711 = vmatprep.subr.bf16.mxu0 0
    %712 = vmatpush1.bf16.msra.mxu0 0
    %713 = vmatprep.subr.bf16.mxu0 0
    %714 = vmatpush1.bf16.msra.mxu0 0
    %715 = vmatprep.subr.bf16.mxu0 0
    %716 = vmatpush1.bf16.msra.mxu0 0
    %717 = vmatprep.subr.bf16.mxu0 0
    %718 = vmatpush1.bf16.msra.mxu0 0
    %719 = vmatprep.subr.bf16.mxu0 0
    %720 = vmatpush1.bf16.msra.mxu0 0
    %721 = vmatprep.mubr.bf16.mxu0 0
    %722 = vmatmul.mubr.bf16.gmra.mrb[0].mxu0 %v569
    %v723 = vpop.f32.mrb[0].mxu0
    %v724 = vadd.f32 0.0, %v723
    %v725 = vpop.f32.mrb[0].mxu0
    %v726 = vpop.f32.mrb[0].mxu0
    %v727 = vpop.f32.mrb[0].mxu0
    %728 = vdwg.mxu0
    %v729 = vpack.c.bf16 %v724, %v724
    %v730 = vadd.bf16 %v729, %v685
    %v731 = vmul.bf16 %v730, 1045249613
    %v732 = vmax.bf16 %v730, %v731
    %s733 = scalar_lea.vmem [#allocation2], 320
    %v734 = vld [vmem:[%s733] sm:$0xf]
    %v735 = vld [vmem:[%s733 + $0x4] sm:$0xf]
    %v736 = vld [vmem:[%s733 + $0x8] sm:$0xf]
    %v737 = vld [vmem:[%s733 + $0xc] sm:$0xf]
    %v738 = vld [vmem:[%s733 + $0x10] sm:$0xf]
    %v739 = vld [vmem:[%s733 + $0x14] sm:$0xf]
    %v740 = vld [vmem:[%s733 + $0x18] sm:$0xf]
    %v741 = vld [vmem:[%s733 + $0x1c] sm:$0xf]
    %v742 = vld [vmem:[%s733 + $0x20] sm:$0xf]
    %v743 = vld [vmem:[%s733 + $0x24] sm:$0xf]
    %v744 = vld [vmem:[%s733 + $0x28] sm:$0xf]
    %v745 = vld [vmem:[%s733 + $0x2c] sm:$0xf]
    %v746 = vld [vmem:[%s733 + $0x30] sm:$0xf]
    %v747 = vld [vmem:[%s733 + $0x34] sm:$0xf]
    %v748 = vld [vmem:[%s733 + $0x38] sm:$0xf]
    %v749 = vld [vmem:[%s733 + $0x3c] sm:$0xf]
    %s750 = scalar_lea.vmem %s1, 5
    %v751 = vld [vmem:[%s750] sm:$0x1]
    %v752 = vpack.c.bf16 %v751, %v751
    %v769 = vunpack.c.l.b16 %v734
    %v770 = vunpack.c.l.b16 %v735
    %v771 = vunpack.c.l.b16 %v736
    %v772 = vunpack.c.l.b16 %v737
    %v773 = vunpack.c.l.b16 %v738
    %v774 = vunpack.c.l.b16 %v739
    %v775 = vunpack.c.l.b16 %v740
    %v776 = vunpack.c.l.b16 %v741
    %v777 = vunpack.c.l.b16 %v742
    %v778 = vunpack.c.l.b16 %v743
    %v779 = vunpack.c.l.b16 %v744
    %v780 = vunpack.c.l.b16 %v745
    %v781 = vunpack.c.l.b16 %v746
    %v782 = vunpack.c.l.b16 %v747
    %v783 = vunpack.c.l.b16 %v748
    %v784 = vunpack.c.l.b16 %v749
    %v785 = vpack.c.b16 %v770, %v769
    %v786 = vpack.c.b16 %v772, %v771
    %v787 = vpack.c.b16 %v774, %v773
    %v788 = vpack.c.b16 %v776, %v775
    %v789 = vpack.c.b16 %v778, %v777
    %v790 = vpack.c.b16 %v780, %v779
    %v791 = vpack.c.b16 %v782, %v781
    %v792 = vpack.c.b16 %v784, %v783
    %801 = vmatprep.subr.bf16.mxu0 0
    %802 = vmatpush1.bf16.msra.mxu0 %v785
    %803 = vmatprep.subr.bf16.mxu0 0
    %804 = vmatpush1.bf16.msra.mxu0 %v786
    %805 = vmatprep.subr.bf16.mxu0 0
    %806 = vmatpush1.bf16.msra.mxu0 %v787
    %807 = vmatprep.subr.bf16.mxu0 0
    %808 = vmatpush1.bf16.msra.mxu0 %v788
    %809 = vmatprep.subr.bf16.mxu0 0
    %810 = vmatpush1.bf16.msra.mxu0 %v789
    %811 = vmatprep.subr.bf16.mxu0 0
    %812 = vmatpush1.bf16.msra.mxu0 %v790
    %813 = vmatprep.subr.bf16.mxu0 0
    %814 = vmatpush1.bf16.msra.mxu0 %v791
    %815 = vmatprep.subr.bf16.mxu0 0
    %816 = vmatpush1.bf16.msra.mxu0 %v792
    %817 = vmatprep.subr.bf16.mxu0 0
    %818 = vmatpush1.bf16.msra.mxu0 0
    %819 = vmatprep.subr.bf16.mxu0 0
    %820 = vmatpush1.bf16.msra.mxu0 0
    %821 = vmatprep.subr.bf16.mxu0 0
    %822 = vmatpush1.bf16.msra.mxu0 0
    %823 = vmatprep.subr.bf16.mxu0 0
    %824 = vmatpush1.bf16.msra.mxu0 0
    %825 = vmatprep.subr.bf16.mxu0 0
    %826 = vmatpush1.bf16.msra.mxu0 0
    %827 = vmatprep.subr.bf16.mxu0 0
    %828 = vmatpush1.bf16.msra.mxu0 0
    %829 = vmatprep.subr.bf16.mxu0 0
    %830 = vmatpush1.bf16.msra.mxu0 0
    %831 = vmatprep.subr.bf16.mxu0 0
    %832 = vmatpush1.bf16.msra.mxu0 0
    %833 = vmatprep.mubr.bf16.mxu0 0
    %834 = vmatmul.mubr.bf16.gmra.mrb[0].mxu0 %v688
    %v835 = vpop.f32.mrb[0].mxu0
    %v836 = vadd.f32 0.0, %v835
    %v837 = vpop.f32.mrb[0].mxu0
    %v838 = vpop.f32.mrb[0].mxu0
    %v839 = vpop.f32.mrb[0].mxu0
    %840 = vdwg.mxu0
    %v841 = vpack.c.bf16 %v836, %v836
    %v843 = vpack.i.b16 %v752, %v752
    %v845 = vlaneseq
    %v846 = vshrl.u32 %v845, 7
    %v847 = vsub.s32 0, %v846
    %v848 = vrot.slane %v843, %v847
    %v849 = vadd.bf16 %v841, %v848
    %v850 = vmul.bf16 %v849, 1045249613
    %v851 = vmax.bf16 %v849, %v850
    %852 = vmatprep.subr.bf16.mxu0 0
    %853 = vmatpush1.bf16.msra.mxu0 %v785
    %854 = vmatprep.subr.bf16.mxu0 0
    %855 = vmatpush1.bf16.msra.mxu0 %v786
    %856 = vmatprep.subr.bf16.mxu0 0
    %857 = vmatpush1.bf16.msra.mxu0 %v787
    %858 = vmatprep.subr.bf16.mxu0 0
    %859 = vmatpush1.bf16.msra.mxu0 %v788
    %860 = vmatprep.subr.bf16.mxu0 0
    %861 = vmatpush1.bf16.msra.mxu0 %v789
    %862 = vmatprep.subr.bf16.mxu0 0
    %863 = vmatpush1.bf16.msra.mxu0 %v790
    %864 = vmatprep.subr.bf16.mxu0 0
    %865 = vmatpush1.bf16.msra.mxu0 %v791
    %866 = vmatprep.subr.bf16.mxu0 0
    %867 = vmatpush1.bf16.msra.mxu0 %v792
    %868 = vmatprep.subr.bf16.mxu0 0
    %869 = vmatpush1.bf16.msra.mxu0 0
    %870 = vmatprep.subr.bf16.mxu0 0
    %871 = vmatpush1.bf16.msra.mxu0 0
    %872 = vmatprep.subr.bf16.mxu0 0
    %873 = vmatpush1.bf16.msra.mxu0 0
    %874 = vmatprep.subr.bf16.mxu0 0
    %875 = vmatpush1.bf16.msra.mxu0 0
    %876 = vmatprep.subr.bf16.mxu0 0
    %877 = vmatpush1.bf16.msra.mxu0 0
    %878 = vmatprep.subr.bf16.mxu0 0
    %879 = vmatpush1.bf16.msra.mxu0 0
    %880 = vmatprep.subr.bf16.mxu0 0
    %881 = vmatpush1.bf16.msra.mxu0 0
    %882 = vmatprep.subr.bf16.mxu0 0
    %883 = vmatpush1.bf16.msra.mxu0 0
    %884 = vmatprep.mubr.bf16.mxu0 0
    %885 = vmatmul.mubr.bf16.gmra.mrb[0].mxu0 %v732
    %v886 = vpop.f32.mrb[0].mxu0
    %v887 = vadd.f32 0.0, %v886
    %v888 = vpop.f32.mrb[0].mxu0
    %v889 = vpop.f32.mrb[0].mxu0
    %v890 = vpop.f32.mrb[0].mxu0
    %891 = vdwg.mxu0
    %v892 = vpack.c.bf16 %v887, %v887
    %v893 = vadd.bf16 %v892, %v848
    %v894 = vmul.bf16 %v893, 1045249613
    %v895 = vmax.bf16 %v893, %v894
    %s896 = scalar_lea.vmem [#allocation2], 384
    %v897 = vld [vmem:[%s896] sm:$0xf]
    %v898 = vld [vmem:[%s896 + $0x4] sm:$0xf]
    %v899 = vld [vmem:[%s896 + $0x8] sm:$0xf]
    %v900 = vld [vmem:[%s896 + $0xc] sm:$0xf]
    %v901 = vld [vmem:[%s896 + $0x10] sm:$0xf]
    %v902 = vld [vmem:[%s896 + $0x14] sm:$0xf]
    %v903 = vld [vmem:[%s896 + $0x18] sm:$0xf]
    %v904 = vld [vmem:[%s896 + $0x1c] sm:$0xf]
    %v905 = vld [vmem:[%s896 + $0x20] sm:$0xf]
    %v906 = vld [vmem:[%s896 + $0x24] sm:$0xf]
    %v907 = vld [vmem:[%s896 + $0x28] sm:$0xf]
    %v908 = vld [vmem:[%s896 + $0x2c] sm:$0xf]
    %v909 = vld [vmem:[%s896 + $0x30] sm:$0xf]
    %v910 = vld [vmem:[%s896 + $0x34] sm:$0xf]
    %v911 = vld [vmem:[%s896 + $0x38] sm:$0xf]
    %v912 = vld [vmem:[%s896 + $0x3c] sm:$0xf]
    %s913 = scalar_lea.vmem %s1, 6
    %v914 = vld [vmem:[%s913] sm:$0x1]
    %v915 = vpack.c.bf16 %v914, %v914
    %v932 = vunpack.c.l.b16 %v897
    %v933 = vunpack.c.l.b16 %v898
    %v934 = vunpack.c.l.b16 %v899
    %v935 = vunpack.c.l.b16 %v900
    %v936 = vunpack.c.l.b16 %v901
    %v937 = vunpack.c.l.b16 %v902
    %v938 = vunpack.c.l.b16 %v903
    %v939 = vunpack.c.l.b16 %v904
    %v940 = vunpack.c.l.b16 %v905
    %v941 = vunpack.c.l.b16 %v906
    %v942 = vunpack.c.l.b16 %v907
    %v943 = vunpack.c.l.b16 %v908
    %v944 = vunpack.c.l.b16 %v909
    %v945 = vunpack.c.l.b16 %v910
    %v946 = vunpack.c.l.b16 %v911
    %v947 = vunpack.c.l.b16 %v912
    %v948 = vpack.c.b16 %v933, %v932
    %v949 = vpack.c.b16 %v935, %v934
    %v950 = vpack.c.b16 %v937, %v936
    %v951 = vpack.c.b16 %v939, %v938
    %v952 = vpack.c.b16 %v941, %v940
    %v953 = vpack.c.b16 %v943, %v942
    %v954 = vpack.c.b16 %v945, %v944
    %v955 = vpack.c.b16 %v947, %v946
    %964 = vmatprep.subr.bf16.mxu0 0
    %965 = vmatpush1.bf16.msra.mxu0 %v948
    %966 = vmatprep.subr.bf16.mxu0 0
    %967 = vmatpush1.bf16.msra.mxu0 %v949
    %968 = vmatprep.subr.bf16.mxu0 0
    %969 = vmatpush1.bf16.msra.mxu0 %v950
    %970 = vmatprep.subr.bf16.mxu0 0
    %971 = vmatpush1.bf16.msra.mxu0 %v951
    %972 = vmatprep.subr.bf16.mxu0 0
    %973 = vmatpush1.bf16.msra.mxu0 %v952
    %974 = vmatprep.subr.bf16.mxu0 0
    %975 = vmatpush1.bf16.msra.mxu0 %v953
    %976 = vmatprep.subr.bf16.mxu0 0
    %977 = vmatpush1.bf16.msra.mxu0 %v954
    %978 = vmatprep.subr.bf16.mxu0 0
    %979 = vmatpush1.bf16.msra.mxu0 %v955
    %980 = vmatprep.subr.bf16.mxu0 0
    %981 = vmatpush1.bf16.msra.mxu0 0
    %982 = vmatprep.subr.bf16.mxu0 0
    %983 = vmatpush1.bf16.msra.mxu0 0
    %984 = vmatprep.subr.bf16.mxu0 0
    %985 = vmatpush1.bf16.msra.mxu0 0
    %986 = vmatprep.subr.bf16.mxu0 0
    %987 = vmatpush1.bf16.msra.mxu0 0
    %988 = vmatprep.subr.bf16.mxu0 0
    %989 = vmatpush1.bf16.msra.mxu0 0
    %990 = vmatprep.subr.bf16.mxu0 0
    %991 = vmatpush1.bf16.msra.mxu0 0
    %992 = vmatprep.subr.bf16.mxu0 0
    %993 = vmatpush1.bf16.msra.mxu0 0
    %994 = vmatprep.subr.bf16.mxu0 0
    %995 = vmatpush1.bf16.msra.mxu0 0
    %996 = vmatprep.mubr.bf16.mxu0 0
    %997 = vmatmul.mubr.bf16.gmra.mrb[0].mxu0 %v851
    %v998 = vpop.f32.mrb[0].mxu0
    %v999 = vadd.f32 0.0, %v998
    %v1000 = vpop.f32.mrb[0].mxu0
    %v1001 = vpop.f32.mrb[0].mxu0
    %v1002 = vpop.f32.mrb[0].mxu0
    %1003 = vdwg.mxu0
    %v1004 = vpack.c.bf16 %v999, %v999
    %v1006 = vpack.i.b16 %v915, %v915
    %v1008 = vlaneseq
    %v1009 = vshrl.u32 %v1008, 7
    %v1010 = vsub.s32 0, %v1009
    %v1011 = vrot.slane %v1006, %v1010
    %v1012 = vadd.bf16 %v1004, %v1011
    %v1013 = vmul.bf16 %v1012, 1045249613
    %v1014 = vmax.bf16 %v1012, %v1013
    %1015 = vmatprep.subr.bf16.mxu0 0
    %1016 = vmatpush1.bf16.msra.mxu0 %v948
    %1017 = vmatprep.subr.bf16.mxu0 0
    %1018 = vmatpush1.bf16.msra.mxu0 %v949
    %1019 = vmatprep.subr.bf16.mxu0 0
    %1020 = vmatpush1.bf16.msra.mxu0 %v950
    %1021 = vmatprep.subr.bf16.mxu0 0
    %1022 = vmatpush1.bf16.msra.mxu0 %v951
    %1023 = vmatprep.subr.bf16.mxu0 0
    %1024 = vmatpush1.bf16.msra.mxu0 %v952
    %1025 = vmatprep.subr.bf16.mxu0 0
    %1026 = vmatpush1.bf16.msra.mxu0 %v953
    %1027 = vmatprep.subr.bf16.mxu0 0
    %1028 = vmatpush1.bf16.msra.mxu0 %v954
    %1029 = vmatprep.subr.bf16.mxu0 0
    %1030 = vmatpush1.bf16.msra.mxu0 %v955
    %1031 = vmatprep.subr.bf16.mxu0 0
    %1032 = vmatpush1.bf16.msra.mxu0 0
    %1033 = vmatprep.subr.bf16.mxu0 0
    %1034 = vmatpush1.bf16.msra.mxu0 0
    %1035 = vmatprep.subr.bf16.mxu0 0
    %1036 = vmatpush1.bf16.msra.mxu0 0
    %1037 = vmatprep.subr.bf16.mxu0 0
    %1038 = vmatpush1.bf16.msra.mxu0 0
    %1039 = vmatprep.subr.bf16.mxu0 0
    %1040 = vmatpush1.bf16.msra.mxu0 0
    %1041 = vmatprep.subr.bf16.mxu0 0
    %1042 = vmatpush1.bf16.msra.mxu0 0
    %1043 = vmatprep.subr.bf16.mxu0 0
    %1044 = vmatpush1.bf16.msra.mxu0 0
    %1045 = vmatprep.subr.bf16.mxu0 0
    %1046 = vmatpush1.bf16.msra.mxu0 0
    %1047 = vmatprep.mubr.bf16.mxu0 0
    %1048 = vmatmul.mubr.bf16.gmra.mrb[0].mxu0 %v895
    %v1049 = vpop.f32.mrb[0].mxu0
    %v1050 = vadd.f32 0.0, %v1049
    %v1051 = vpop.f32.mrb[0].mxu0
    %v1052 = vpop.f32.mrb[0].mxu0
    %v1053 = vpop.f32.mrb[0].mxu0
    %1054 = vdwg.mxu0
    %v1055 = vpack.c.bf16 %v1050, %v1050
    %v1056 = vadd.bf16 %v1055, %v1011
    %v1057 = vmul.bf16 %v1056, 1045249613
    %v1058 = vmax.bf16 %v1056, %v1057
    %s1059 = scalar_lea.vmem [#allocation2], 448
    %v1060 = vld [vmem:[%s1059] sm:$0xf]
    %v1061 = vld [vmem:[%s1059 + $0x4] sm:$0xf]
    %v1062 = vld [vmem:[%s1059 + $0x8] sm:$0xf]
    %v1063 = vld [vmem:[%s1059 + $0xc] sm:$0xf]
    %v1064 = vld [vmem:[%s1059 + $0x10] sm:$0xf]
    %v1065 = vld [vmem:[%s1059 + $0x14] sm:$0xf]
    %v1066 = vld [vmem:[%s1059 + $0x18] sm:$0xf]
    %v1067 = vld [vmem:[%s1059 + $0x1c] sm:$0xf]
    %v1068 = vld [vmem:[%s1059 + $0x20] sm:$0xf]
    %v1069 = vld [vmem:[%s1059 + $0x24] sm:$0xf]
    %v1070 = vld [vmem:[%s1059 + $0x28] sm:$0xf]
    %v1071 = vld [vmem:[%s1059 + $0x2c] sm:$0xf]
    %v1072 = vld [vmem:[%s1059 + $0x30] sm:$0xf]
    %v1073 = vld [vmem:[%s1059 + $0x34] sm:$0xf]
    %v1074 = vld [vmem:[%s1059 + $0x38] sm:$0xf]
    %v1075 = vld [vmem:[%s1059 + $0x3c] sm:$0xf]
    %s1076 = scalar_lea.vmem %s1, 7
    %v1077 = vld [vmem:[%s1076] sm:$0x1]
    %v1078 = vpack.c.bf16 %v1077, %v1077
    %v1095 = vunpack.c.l.b16 %v1060
    %v1096 = vunpack.c.l.b16 %v1061
    %v1097 = vunpack.c.l.b16 %v1062
    %v1098 = vunpack.c.l.b16 %v1063
    %v1099 = vunpack.c.l.b16 %v1064
    %v1100 = vunpack.c.l.b16 %v1065
    %v1101 = vunpack.c.l.b16 %v1066
    %v1102 = vunpack.c.l.b16 %v1067
    %v1103 = vunpack.c.l.b16 %v1068
    %v1104 = vunpack.c.l.b16 %v1069
    %v1105 = vunpack.c.l.b16 %v1070
    %v1106 = vunpack.c.l.b16 %v1071
    %v1107 = vunpack.c.l.b16 %v1072
    %v1108 = vunpack.c.l.b16 %v1073
    %v1109 = vunpack.c.l.b16 %v1074
    %v1110 = vunpack.c.l.b16 %v1075
    %v1111 = vpack.c.b16 %v1096, %v1095
    %v1112 = vpack.c.b16 %v1098, %v1097
    %v1113 = vpack.c.b16 %v1100, %v1099
    %v1114 = vpack.c.b16 %v1102, %v1101
    %v1115 = vpack.c.b16 %v1104, %v1103
    %v1116 = vpack.c.b16 %v1106, %v1105
    %v1117 = vpack.c.b16 %v1108, %v1107
    %v1118 = vpack.c.b16 %v1110, %v1109
    %1127 = vmatprep.subr.bf16.mxu0 0
    %1128 = vmatpush1.bf16.msra.mxu0 %v1111
    %1129 = vmatprep.subr.bf16.mxu0 0
    %1130 = vmatpush1.bf16.msra.mxu0 %v1112
    %1131 = vmatprep.subr.bf16.mxu0 0
    %1132 = vmatpush1.bf16.msra.mxu0 %v1113
    %1133 = vmatprep.subr.bf16.mxu0 0
    %1134 = vmatpush1.bf16.msra.mxu0 %v1114
    %1135 = vmatprep.subr.bf16.mxu0 0
    %1136 = vmatpush1.bf16.msra.mxu0 %v1115
    %1137 = vmatprep.subr.bf16.mxu0 0
    %1138 = vmatpush1.bf16.msra.mxu0 %v1116
    %1139 = vmatprep.subr.bf16.mxu0 0
    %1140 = vmatpush1.bf16.msra.mxu0 %v1117
    %1141 = vmatprep.subr.bf16.mxu0 0
    %1142 = vmatpush1.bf16.msra.mxu0 %v1118
    %1143 = vmatprep.subr.bf16.mxu0 0
    %1144 = vmatpush1.bf16.msra.mxu0 0
    %1145 = vmatprep.subr.bf16.mxu0 0
    %1146 = vmatpush1.bf16.msra.mxu0 0
    %1147 = vmatprep.subr.bf16.mxu0 0
    %1148 = vmatpush1.bf16.msra.mxu0 0
    %1149 = vmatprep.subr.bf16.mxu0 0
    %1150 = vmatpush1.bf16.msra.mxu0 0
    %1151 = vmatprep.subr.bf16.mxu0 0
    %1152 = vmatpush1.bf16.msra.mxu0 0
    %1153 = vmatprep.subr.bf16.mxu0 0
    %1154 = vmatpush1.bf16.msra.mxu0 0
    %1155 = vmatprep.subr.bf16.mxu0 0
    %1156 = vmatpush1.bf16.msra.mxu0 0
    %1157 = vmatprep.subr.bf16.mxu0 0
    %1158 = vmatpush1.bf16.msra.mxu0 0
    %1159 = vmatprep.mubr.bf16.mxu0 0
    %1160 = vmatmul.mubr.bf16.gmra.mrb[0].mxu0 %v1014
    %v1161 = vpop.f32.mrb[0].mxu0
    %v1162 = vadd.f32 0.0, %v1161
    %v1163 = vpop.f32.mrb[0].mxu0
    %v1164 = vpop.f32.mrb[0].mxu0
    %v1165 = vpop.f32.mrb[0].mxu0
    %1166 = vdwg.mxu0
    %v1167 = vpack.c.bf16 %v1162, %v1162
    %v1169 = vpack.i.b16 %v1078, %v1078
    %v1171 = vlaneseq
    %v1172 = vshrl.u32 %v1171, 7
    %v1173 = vsub.s32 0, %v1172
    %v1174 = vrot.slane %v1169, %v1173
    %v1175 = vadd.bf16 %v1167, %v1174
    %v1176 = vmul.bf16 %v1175, 1045249613
    %v1177 = vmax.bf16 %v1175, %v1176
    %1178 = vmatprep.subr.bf16.mxu0 0
    %1179 = vmatpush1.bf16.msra.mxu0 %v1111
    %1180 = vmatprep.subr.bf16.mxu0 0
    %1181 = vmatpush1.bf16.msra.mxu0 %v1112
    %1182 = vmatprep.subr.bf16.mxu0 0
    %1183 = vmatpush1.bf16.msra.mxu0 %v1113
    %1184 = vmatprep.subr.bf16.mxu0 0
    %1185 = vmatpush1.bf16.msra.mxu0 %v1114
    %1186 = vmatprep.subr.bf16.mxu0 0
    %1187 = vmatpush1.bf16.msra.mxu0 %v1115
    %1188 = vmatprep.subr.bf16.mxu0 0
    %1189 = vmatpush1.bf16.msra.mxu0 %v1116
    %1190 = vmatprep.subr.bf16.mxu0 0
    %1191 = vmatpush1.bf16.msra.mxu0 %v1117
    %1192 = vmatprep.subr.bf16.mxu0 0
    %1193 = vmatpush1.bf16.msra.mxu0 %v1118
    %1194 = vmatprep.subr.bf16.mxu0 0
    %1195 = vmatpush1.bf16.msra.mxu0 0
    %1196 = vmatprep.subr.bf16.mxu0 0
    %1197 = vmatpush1.bf16.msra.mxu0 0
    %1198 = vmatprep.subr.bf16.mxu0 0
    %1199 = vmatpush1.bf16.msra.mxu0 0
    %1200 = vmatprep.subr.bf16.mxu0 0
    %1201 = vmatpush1.bf16.msra.mxu0 0
    %1202 = vmatprep.subr.bf16.mxu0 0
    %1203 = vmatpush1.bf16.msra.mxu0 0
    %1204 = vmatprep.subr.bf16.mxu0 0
    %1205 = vmatpush1.bf16.msra.mxu0 0
    %1206 = vmatprep.subr.bf16.mxu0 0
    %1207 = vmatpush1.bf16.msra.mxu0 0
    %1208 = vmatprep.subr.bf16.mxu0 0
    %1209 = vmatpush1.bf16.msra.mxu0 0
    %1210 = vmatprep.mubr.bf16.mxu0 0
    %1211 = vmatmul.mubr.bf16.gmra.mrb[0].mxu0 %v1058
    %v1212 = vpop.f32.mrb[0].mxu0
    %v1213 = vadd.f32 0.0, %v1212
    %v1214 = vpop.f32.mrb[0].mxu0
    %v1215 = vpop.f32.mrb[0].mxu0
    %v1216 = vpop.f32.mrb[0].mxu0
    %1217 = vdwg.mxu0
    %v1218 = vpack.c.bf16 %v1213, %v1213
    %v1219 = vadd.bf16 %v1218, %v1174
    %v1220 = vmul.bf16 %v1219, 1045249613
    %v1221 = vmax.bf16 %v1219, %v1220
    %s1222 = scalar_lea.vmem [#allocation2], 512
    %v1223 = vld [vmem:[%s1222] sm:$0xf]
    %v1224 = vld [vmem:[%s1222 + $0x4] sm:$0xf]
    %v1225 = vld [vmem:[%s1222 + $0x8] sm:$0xf]
    %v1226 = vld [vmem:[%s1222 + $0xc] sm:$0xf]
    %v1227 = vld [vmem:[%s1222 + $0x10] sm:$0xf]
    %v1228 = vld [vmem:[%s1222 + $0x14] sm:$0xf]
    %v1229 = vld [vmem:[%s1222 + $0x18] sm:$0xf]
    %v1230 = vld [vmem:[%s1222 + $0x1c] sm:$0xf]
    %v1231 = vld [vmem:[%s1222 + $0x20] sm:$0xf]
    %v1232 = vld [vmem:[%s1222 + $0x24] sm:$0xf]
    %v1233 = vld [vmem:[%s1222 + $0x28] sm:$0xf]
    %v1234 = vld [vmem:[%s1222 + $0x2c] sm:$0xf]
    %v1235 = vld [vmem:[%s1222 + $0x30] sm:$0xf]
    %v1236 = vld [vmem:[%s1222 + $0x34] sm:$0xf]
    %v1237 = vld [vmem:[%s1222 + $0x38] sm:$0xf]
    %v1238 = vld [vmem:[%s1222 + $0x3c] sm:$0xf]
    %s1239 = scalar_lea.vmem %s1, 8
    %v1240 = vld [vmem:[%s1239] sm:$0x1]
    %v1241 = vpack.c.bf16 %v1240, %v1240
    %v1258 = vunpack.c.l.b16 %v1223
    %v1259 = vunpack.c.l.b16 %v1224
    %v1260 = vunpack.c.l.b16 %v1225
    %v1261 = vunpack.c.l.b16 %v1226
    %v1262 = vunpack.c.l.b16 %v1227
    %v1263 = vunpack.c.l.b16 %v1228
    %v1264 = vunpack.c.l.b16 %v1229
    %v1265 = vunpack.c.l.b16 %v1230
    %v1266 = vunpack.c.l.b16 %v1231
    %v1267 = vunpack.c.l.b16 %v1232
    %v1268 = vunpack.c.l.b16 %v1233
    %v1269 = vunpack.c.l.b16 %v1234
    %v1270 = vunpack.c.l.b16 %v1235
    %v1271 = vunpack.c.l.b16 %v1236
    %v1272 = vunpack.c.l.b16 %v1237
    %v1273 = vunpack.c.l.b16 %v1238
    %v1274 = vpack.c.b16 %v1259, %v1258
    %v1275 = vpack.c.b16 %v1261, %v1260
    %v1276 = vpack.c.b16 %v1263, %v1262
    %v1277 = vpack.c.b16 %v1265, %v1264
    %v1278 = vpack.c.b16 %v1267, %v1266
    %v1279 = vpack.c.b16 %v1269, %v1268
    %v1280 = vpack.c.b16 %v1271, %v1270
    %v1281 = vpack.c.b16 %v1273, %v1272
    %1290 = vmatprep.subr.bf16.mxu0 0
    %1291 = vmatpush1.bf16.msra.mxu0 %v1274
    %1292 = vmatprep.subr.bf16.mxu0 0
    %1293 = vmatpush1.bf16.msra.mxu0 %v1275
    %1294 = vmatprep.subr.bf16.mxu0 0
    %1295 = vmatpush1.bf16.msra.mxu0 %v1276
    %1296 = vmatprep.subr.bf16.mxu0 0
    %1297 = vmatpush1.bf16.msra.mxu0 %v1277
    %1298 = vmatprep.subr.bf16.mxu0 0
    %1299 = vmatpush1.bf16.msra.mxu0 %v1278
    %1300 = vmatprep.subr.bf16.mxu0 0
    %1301 = vmatpush1.bf16.msra.mxu0 %v1279
    %1302 = vmatprep.subr.bf16.mxu0 0
    %1303 = vmatpush1.bf16.msra.mxu0 %v1280
    %1304 = vmatprep.subr.bf16.mxu0 0
    %1305 = vmatpush1.bf16.msra.mxu0 %v1281
    %1306 = vmatprep.subr.bf16.mxu0 0
    %1307 = vmatpush1.bf16.msra.mxu0 0
    %1308 = vmatprep.subr.bf16.mxu0 0
    %1309 = vmatpush1.bf16.msra.mxu0 0
    %1310 = vmatprep.subr.bf16.mxu0 0
    %1311 = vmatpush1.bf16.msra.mxu0 0
    %1312 = vmatprep.subr.bf16.mxu0 0
    %1313 = vmatpush1.bf16.msra.mxu0 0
    %1314 = vmatprep.subr.bf16.mxu0 0
    %1315 = vmatpush1.bf16.msra.mxu0 0
    %1316 = vmatprep.subr.bf16.mxu0 0
    %1317 = vmatpush1.bf16.msra.mxu0 0
    %1318 = vmatprep.subr.bf16.mxu0 0
    %1319 = vmatpush1.bf16.msra.mxu0 0
    %1320 = vmatprep.subr.bf16.mxu0 0
    %1321 = vmatpush1.bf16.msra.mxu0 0
    %1322 = vmatprep.mubr.bf16.mxu0 0
    %1323 = vmatmul.mubr.bf16.gmra.mrb[0].mxu0 %v1177
    %v1324 = vpop.f32.mrb[0].mxu0
    %v1325 = vadd.f32 0.0, %v1324
    %v1326 = vpop.f32.mrb[0].mxu0
    %v1327 = vpop.f32.mrb[0].mxu0
    %v1328 = vpop.f32.mrb[0].mxu0
    %1329 = vdwg.mxu0
    %v1330 = vpack.c.bf16 %v1325, %v1325
    %v1332 = vpack.i.b16 %v1241, %v1241
    %v1334 = vlaneseq
    %v1335 = vshrl.u32 %v1334, 7
    %v1336 = vsub.s32 0, %v1335
    %v1337 = vrot.slane %v1332, %v1336
    %v1338 = vadd.bf16 %v1330, %v1337
    %v1339 = vmul.bf16 %v1338, 1045249613
    %v1340 = vmax.bf16 %v1338, %v1339
    %1341 = vmatprep.subr.bf16.mxu0 0
    %1342 = vmatpush1.bf16.msra.mxu0 %v1274
    %1343 = vmatprep.subr.bf16.mxu0 0
    %1344 = vmatpush1.bf16.msra.mxu0 %v1275
    %1345 = vmatprep.subr.bf16.mxu0 0
    %1346 = vmatpush1.bf16.msra.mxu0 %v1276
    %1347 = vmatprep.subr.bf16.mxu0 0
    %1348 = vmatpush1.bf16.msra.mxu0 %v1277
    %1349 = vmatprep.subr.bf16.mxu0 0
    %1350 = vmatpush1.bf16.msra.mxu0 %v1278
    %1351 = vmatprep.subr.bf16.mxu0 0
    %1352 = vmatpush1.bf16.msra.mxu0 %v1279
    %1353 = vmatprep.subr.bf16.mxu0 0
    %1354 = vmatpush1.bf16.msra.mxu0 %v1280
    %1355 = vmatprep.subr.bf16.mxu0 0
    %1356 = vmatpush1.bf16.msra.mxu0 %v1281
    %1357 = vmatprep.subr.bf16.mxu0 0
    %1358 = vmatpush1.bf16.msra.mxu0 0
    %1359 = vmatprep.subr.bf16.mxu0 0
    %1360 = vmatpush1.bf16.msra.mxu0 0
    %1361 = vmatprep.subr.bf16.mxu0 0
    %1362 = vmatpush1.bf16.msra.mxu0 0
    %1363 = vmatprep.subr.bf16.mxu0 0
    %1364 = vmatpush1.bf16.msra.mxu0 0
    %1365 = vmatprep.subr.bf16.mxu0 0
    %1366 = vmatpush1.bf16.msra.mxu0 0
    %1367 = vmatprep.subr.bf16.mxu0 0
    %1368 = vmatpush1.bf16.msra.mxu0 0
    %1369 = vmatprep.subr.bf16.mxu0 0
    %1370 = vmatpush1.bf16.msra.mxu0 0
    %1371 = vmatprep.subr.bf16.mxu0 0
    %1372 = vmatpush1.bf16.msra.mxu0 0
    %1373 = vmatprep.mubr.bf16.mxu0 0
    %1374 = vmatmul.mubr.bf16.gmra.mrb[0].mxu0 %v1221
    %v1375 = vpop.f32.mrb[0].mxu0
    %v1376 = vadd.f32 0.0, %v1375
    %v1377 = vpop.f32.mrb[0].mxu0
    %v1378 = vpop.f32.mrb[0].mxu0
    %v1379 = vpop.f32.mrb[0].mxu0
    %1380 = vdwg.mxu0
    %v1381 = vpack.c.bf16 %v1376, %v1376
    %v1382 = vadd.bf16 %v1381, %v1337
    %v1383 = vmul.bf16 %v1382, 1045249613
    %v1384 = vmax.bf16 %v1382, %v1383
    %s1385 = scalar_lea.vmem [#allocation2], 576
    %v1386 = vld [vmem:[%s1385] sm:$0xf]
    %v1387 = vld [vmem:[%s1385 + $0x4] sm:$0xf]
    %v1388 = vld [vmem:[%s1385 + $0x8] sm:$0xf]
    %v1389 = vld [vmem:[%s1385 + $0xc] sm:$0xf]
    %v1390 = vld [vmem:[%s1385 + $0x10] sm:$0xf]
    %v1391 = vld [vmem:[%s1385 + $0x14] sm:$0xf]
    %v1392 = vld [vmem:[%s1385 + $0x18] sm:$0xf]
    %v1393 = vld [vmem:[%s1385 + $0x1c] sm:$0xf]
    %v1394 = vld [vmem:[%s1385 + $0x20] sm:$0xf]
    %v1395 = vld [vmem:[%s1385 + $0x24] sm:$0xf]
    %v1396 = vld [vmem:[%s1385 + $0x28] sm:$0xf]
    %v1397 = vld [vmem:[%s1385 + $0x2c] sm:$0xf]
    %v1398 = vld [vmem:[%s1385 + $0x30] sm:$0xf]
    %v1399 = vld [vmem:[%s1385 + $0x34] sm:$0xf]
    %v1400 = vld [vmem:[%s1385 + $0x38] sm:$0xf]
    %v1401 = vld [vmem:[%s1385 + $0x3c] sm:$0xf]
    %s1402 = scalar_lea.vmem %s1, 9
    %v1403 = vld [vmem:[%s1402] sm:$0x1]
    %v1404 = vpack.c.bf16 %v1403, %v1403
    %v1421 = vunpack.c.l.b16 %v1386
    %v1422 = vunpack.c.l.b16 %v1387
    %v1423 = vunpack.c.l.b16 %v1388
    %v1424 = vunpack.c.l.b16 %v1389
    %v1425 = vunpack.c.l.b16 %v1390
    %v1426 = vunpack.c.l.b16 %v1391
    %v1427 = vunpack.c.l.b16 %v1392
    %v1428 = vunpack.c.l.b16 %v1393
    %v1429 = vunpack.c.l.b16 %v1394
    %v1430 = vunpack.c.l.b16 %v1395
    %v1431 = vunpack.c.l.b16 %v1396
    %v1432 = vunpack.c.l.b16 %v1397
    %v1433 = vunpack.c.l.b16 %v1398
    %v1434 = vunpack.c.l.b16 %v1399
    %v1435 = vunpack.c.l.b16 %v1400
    %v1436 = vunpack.c.l.b16 %v1401
    %v1437 = vpack.c.b16 %v1422, %v1421
    %v1438 = vpack.c.b16 %v1424, %v1423
    %v1439 = vpack.c.b16 %v1426, %v1425
    %v1440 = vpack.c.b16 %v1428, %v1427
    %v1441 = vpack.c.b16 %v1430, %v1429
    %v1442 = vpack.c.b16 %v1432, %v1431
    %v1443 = vpack.c.b16 %v1434, %v1433
    %v1444 = vpack.c.b16 %v1436, %v1435
    %1453 = vmatprep.subr.bf16.mxu0 0
    %1454 = vmatpush1.bf16.msra.mxu0 %v1437
    %1455 = vmatprep.subr.bf16.mxu0 0
    %1456 = vmatpush1.bf16.msra.mxu0 %v1438
    %1457 = vmatprep.subr.bf16.mxu0 0
    %1458 = vmatpush1.bf16.msra.mxu0 %v1439
    %1459 = vmatprep.subr.bf16.mxu0 0
    %1460 = vmatpush1.bf16.msra.mxu0 %v1440
    %1461 = vmatprep.subr.bf16.mxu0 0
    %1462 = vmatpush1.bf16.msra.mxu0 %v1441
    %1463 = vmatprep.subr.bf16.mxu0 0
    %1464 = vmatpush1.bf16.msra.mxu0 %v1442
    %1465 = vmatprep.subr.bf16.mxu0 0
    %1466 = vmatpush1.bf16.msra.mxu0 %v1443
    %1467 = vmatprep.subr.bf16.mxu0 0
    %1468 = vmatpush1.bf16.msra.mxu0 %v1444
    %1469 = vmatprep.subr.bf16.mxu0 0
    %1470 = vmatpush1.bf16.msra.mxu0 0
    %1471 = vmatprep.subr.bf16.mxu0 0
    %1472 = vmatpush1.bf16.msra.mxu0 0
    %1473 = vmatprep.subr.bf16.mxu0 0
    %1474 = vmatpush1.bf16.msra.mxu0 0
    %1475 = vmatprep.subr.bf16.mxu0 0
    %1476 = vmatpush1.bf16.msra.mxu0 0
    %1477 = vmatprep.subr.bf16.mxu0 0
    %1478 = vmatpush1.bf16.msra.mxu0 0
    %1479 = vmatprep.subr.bf16.mxu0 0
    %1480 = vmatpush1.bf16.msra.mxu0 0
    %1481 = vmatprep.subr.bf16.mxu0 0
    %1482 = vmatpush1.bf16.msra.mxu0 0
    %1483 = vmatprep.subr.bf16.mxu0 0
    %1484 = vmatpush1.bf16.msra.mxu0 0
    %1485 = vmatprep.mubr.bf16.mxu0 0
    %1486 = vmatmul.mubr.bf16.gmra.mrb[0].mxu0 %v1340
    %v1487 = vpop.f32.mrb[0].mxu0
    %v1488 = vadd.f32 0.0, %v1487
    %v1489 = vpop.f32.mrb[0].mxu0
    %v1490 = vpop.f32.mrb[0].mxu0
    %v1491 = vpop.f32.mrb[0].mxu0
    %1492 = vdwg.mxu0
    %v1493 = vpack.c.bf16 %v1488, %v1488
    %v1495 = vpack.i.b16 %v1404, %v1404
    %v1497 = vlaneseq
    %v1498 = vshrl.u32 %v1497, 7
    %v1499 = vsub.s32 0, %v1498
    %v1500 = vrot.slane %v1495, %v1499
    %v1501 = vadd.bf16 %v1493, %v1500
    %v1502 = vmul.bf16 %v1501, 1045249613
    %v1503 = vmax.bf16 %v1501, %v1502
    %1504 = vmatprep.subr.bf16.mxu0 0
    %1505 = vmatpush1.bf16.msra.mxu0 %v1437
    %1506 = vmatprep.subr.bf16.mxu0 0
    %1507 = vmatpush1.bf16.msra.mxu0 %v1438
    %1508 = vmatprep.subr.bf16.mxu0 0
    %1509 = vmatpush1.bf16.msra.mxu0 %v1439
    %1510 = vmatprep.subr.bf16.mxu0 0
    %1511 = vmatpush1.bf16.msra.mxu0 %v1440
    %1512 = vmatprep.subr.bf16.mxu0 0
    %1513 = vmatpush1.bf16.msra.mxu0 %v1441
    %1514 = vmatprep.subr.bf16.mxu0 0
    %1515 = vmatpush1.bf16.msra.mxu0 %v1442
    %1516 = vmatprep.subr.bf16.mxu0 0
    %1517 = vmatpush1.bf16.msra.mxu0 %v1443
    %1518 = vmatprep.subr.bf16.mxu0 0
    %1519 = vmatpush1.bf16.msra.mxu0 %v1444
    %1520 = vmatprep.subr.bf16.mxu0 0
    %1521 = vmatpush1.bf16.msra.mxu0 0
    %1522 = vmatprep.subr.bf16.mxu0 0
    %1523 = vmatpush1.bf16.msra.mxu0 0
    %1524 = vmatprep.subr.bf16.mxu0 0
    %1525 = vmatpush1.bf16.msra.mxu0 0
    %1526 = vmatprep.subr.bf16.mxu0 0
    %1527 = vmatpush1.bf16.msra.mxu0 0
    %1528 = vmatprep.subr.bf16.mxu0 0
    %1529 = vmatpush1.bf16.msra.mxu0 0
    %1530 = vmatprep.subr.bf16.mxu0 0
    %1531 = vmatpush1.bf16.msra.mxu0 0
    %1532 = vmatprep.subr.bf16.mxu0 0
    %1533 = vmatpush1.bf16.msra.mxu0 0
    %1534 = vmatprep.subr.bf16.mxu0 0
    %1535 = vmatpush1.bf16.msra.mxu0 0
    %1536 = vmatprep.mubr.bf16.mxu0 0
    %1537 = vmatmul.mubr.bf16.gmra.mrb[0].mxu0 %v1384
    %v1538 = vpop.f32.mrb[0].mxu0
    %v1539 = vadd.f32 0.0, %v1538
    %v1540 = vpop.f32.mrb[0].mxu0
    %v1541 = vpop.f32.mrb[0].mxu0
    %v1542 = vpop.f32.mrb[0].mxu0
    %1543 = vdwg.mxu0
    %v1544 = vpack.c.bf16 %v1539, %v1539
    %v1545 = vadd.bf16 %v1544, %v1500
    %v1546 = vmul.bf16 %v1545, 1045249613
    %v1547 = vmax.bf16 %v1545, %v1546
    %v1548 = vunpack.c.l.bf16 %v1503
    %vm1549 = vcmask 7168
    %1550 = vst.msk [vmem:[%s3] sm:$0xff] %vm1549, %v1548
    %v1551 = vunpack.c.l.bf16 %v1547
    %1552 = vst.msk [vmem:[%s3 + $0x8] sm:$0xff] %vm1549, %v1551
    // Predicated region
    $region18: #{discriminator_forward.1} parent=1 // pred_check
      _
    $region19: #{discriminator_forward.1} parent=1 // pred_check_branch
      %1554 = sbr.rel (0) target = $region21
    $region20: #{discriminator_forward.1} parent=1 // pred_region
      _
    $region21: #{discriminator_forward.1} parent=1 // pred_fallthru
      _
    // Predicated region
    $region22: #{discriminator_forward.1} parent=1 // pred_check
      _
    $region23: #{discriminator_forward.1} parent=1 // pred_check_branch
      %1556 = sbr.rel (0) target = $region25
    $region24: #{discriminator_forward.1} parent=1 // pred_region
      _
    $region25: #{discriminator_forward.1} parent=1 // pred_fallthru
      _
    %1557 = vsyncpa [#allocation3], 1

</llo_original>
